<compile_context>
chip_gen: v7x
topology: tpu7x:2x2x1
jax: 0.10.0
libtpu: 0.0.40
codegen_flags: <defaults>
</compile_context>

<pallas_src>
import jax
import jax.numpy as jnp
from jax.experimental import pallas as pl
from jax.experimental.pallas import tpu as pltpu

EPS = 1e-5
LEAKY_SLOPE = 0.01              # torch.nn.LeakyReLU default
LANE = 128


def _round_up(x, m):
    return ((x + m - 1) // m) * m


def _cdiv(a, b):
    return -(-a // b)


def _vmem_limit_bytes():
    # ~3/4 of physical VMEM: v5e/v6e (128 MiB) -> 96 MiB, v7x (64 MiB) -> 48 MiB.
    try:
        cap = getattr(pltpu.get_tpu_info(), "vmem_capacity_bytes", None)
        if cap:
            return int(cap) * 3 // 4
    except Exception:
        pass
    return 48 * 1024 * 1024


def _pick_batch_tile(B, fin_p, fout_p, vmem_limit, block_b):
    """Largest batch tile that fits VMEM, keeping >=2 tiles and low padding."""
    # Per-batch-row streaming VMEM (bytes):
    #   pass 1: x f32 x2 bufs + y bf16 x2 bufs + ~fout_p*4 f32 accumulator in flight
    #   pass 2: y bf16 x2 bufs + out f32 x2 bufs
    row1 = fin_p * 4 * 2 + fout_p * 2 * 2 + fout_p * 4
    row2 = fout_p * 2 * 2 + fout_p * 4 * 2
    resident = fin_p * fout_p * 2 + 8 * fout_p * 4   # single-buffered weight + params
    avail = max(vmem_limit - resident - (2 << 20), 2 << 20)
    cap = max(16, (avail // max(row1, row2)) // 16 * 16)
    max_tb = max(16, min(block_b, cap))
    if B <= 16:
        tb = _round_up(B, 8)
    else:
        n_tiles = max(2, _cdiv(B, max_tb))           # keep both v7x cores busy
        tb = min(max_tb, _round_up(_cdiv(B, n_tiles), 16))
    bp = _round_up(B, tb)
    return tb, bp, bp // tb


def dense_block(x, w, b, sn_weight, sn_bias, mean_weight, var_weight,
                *, block_b=512):
    """Dense_Block forward: SwitchNorm1d(LeakyReLU(x @ w.T + b)).

    x: (B, Fin) f32.  w: (Fout, Fin) (PyTorch nn.Linear layout).  Returns (B, Fout) f32.
    Requires B >= 2 and Fout >= 2 (unbiased variances, matching the torch module).
    """
    B, Fin = x.shape
    Fout = w.shape[0]
    assert B >= 2 and Fout >= 2, "unbiased variances require B >= 2 and Fout >= 2"

    # ---- padded / tiled geometry -------------------------------------------
    fin_p = _round_up(Fin, LANE)
    fout_p = _round_up(Fout, LANE)
    vmem_limit = _vmem_limit_bytes()
    tb, bp, nbt = _pick_batch_tile(B, fin_p, fout_p, vmem_limit, block_b)

    # ---- parameter glue (tiny; constant-folded / hoisted under jit) --------
    # TODO(synk): if this layer is applied repeatedly, pre-transpose/pad/cast the
    # weight once outside the per-call hot path instead of per call.
    x32 = x.astype(jnp.float32)
    if bp != B or fin_p != Fin:
        x32 = jnp.pad(x32, ((0, bp - B), (0, fin_p - Fin)))
    w_bf = jnp.pad(jnp.transpose(w).astype(jnp.float32),
                   ((0, fin_p - Fin), (0, fout_p - Fout))).astype(jnp.bfloat16)
    b2 = jnp.pad(b.reshape(-1).astype(jnp.float32),
                 (0, fout_p - Fout)).reshape(1, fout_p)
    gamma = jnp.pad(sn_weight.reshape(-1).astype(jnp.float32),
                    (0, fout_p - Fout)).reshape(1, fout_p)
    beta = jnp.pad(sn_bias.reshape(-1).astype(jnp.float32),
                   (0, fout_p - Fout)).reshape(1, fout_p)
    mw = jax.nn.softmax(mean_weight.reshape(-1).astype(jnp.float32))   # (2,)
    vw = jax.nn.softmax(var_weight.reshape(-1).astype(jnp.float32))    # (2,)

    resident = pl.Buffered(1)   # grid-invariant operands: no double buffering

    # ========================================================================
    # Pass 1: y = leaky_relu(x @ W^T + b)  (bf16 out)  + f32 LN row sums
    #         + per-tile BN partial sums from the f32 accumulator
    # ========================================================================
    def pass1_kernel(x_ref, wt_ref, b_ref, y_ref, ps_ref, rs_ref, rsq_ref):
        xb = x_ref[...].astype(jnp.bfloat16)          # in-kernel cast (no HBM bf16 copy)
        y = jnp.dot(xb, wt_ref[...],
                    preferred_element_type=jnp.float32) + b_ref[...]
        y = jnp.maximum(y, LEAKY_SLOPE * y)           # LeakyReLU, single VPU op
        y_ref[...] = y.astype(jnp.bfloat16)           # bf16 inter-pass intermediate

        # Per-row layer-norm sums from the f32 accumulator (padded cols are 0,
        # so plain row sums with the true-Fout divisor are exact).
        rs_ref[...] = jnp.sum(y, axis=1, keepdims=True)
        rsq_ref[...] = jnp.sum(y * y, axis=1, keepdims=True)

        # Per-feature batch-norm partial sums; mask zero-padded batch rows.
        # TODO(synk): if a bundle dump shows XLU saturation at large tb, compute
        # these as ones(1,tb) @ y and ones(1,tb) @ (y*y) on the MXU instead.
        if bp != B:
            row = (pl.program_id(0) * tb
                   + jax.lax.broadcasted_iota(jnp.int32, y.shape, 0))
            y = jnp.where(row < B, y, 0.0)
        s = jnp.sum(y, axis=0, keepdims=True)         # (1, fout_p)
        sq = jnp.sum(y * y, axis=0, keepdims=True)    # (1, fout_p)
        ps_ref[...] = jnp.concatenate([s, sq], axis=0)[None]   # (1, 2, fout_p)

    y_pad, partials, rs, rsq = pl.pallas_call(
        pass1_kernel,
        out_shape=(jax.ShapeDtypeStruct((bp, fout_p), jnp.bfloat16),
                   jax.ShapeDtypeStruct((nbt, 2, fout_p), jnp.float32),
                   jax.ShapeDtypeStruct((bp, 1), jnp.float32),
                   jax.ShapeDtypeStruct((bp, 1), jnp.float32)),
        grid=(nbt,),
        in_specs=[
            pl.BlockSpec((tb, fin_p), lambda i: (i, 0)),            # x tile (f32)
            # TODO(synk): N/K-tile the weight (tn=256, reduction axis "arbitrary"
            # with a pl.when-gated BN/LN emit) once fin_p*fout_p*2 bytes no longer
            # fits the VMEM budget (most relevant on v7x's 64 MiB VMEM).
            pl.BlockSpec((fin_p, fout_p), lambda i: (0, 0),
                         pipeline_mode=resident),                    # weight, 1-buffered
            pl.BlockSpec((1, fout_p), lambda i: (0, 0),
                         pipeline_mode=resident),                    # bias
        ],
        out_specs=(
            pl.BlockSpec((tb, fout_p), lambda i: (i, 0)),            # y tile (bf16)
            pl.BlockSpec((1, 2, fout_p), lambda i: (i, 0, 0)),       # BN partial sums
            pl.BlockSpec((tb, 1), lambda i: (i, 0)),                 # LN row sums
            pl.BlockSpec((tb, 1), lambda i: (i, 0)),                 # LN row sums of squares
        ),
        compiler_params=pltpu.CompilerParams(
            dimension_semantics=("parallel",),
            vmem_limit_bytes=vmem_limit),
        cost_estimate=pl.CostEstimate(
            flops=2 * bp * fin_p * fout_p,
            transcendentals=0,
            bytes_accessed=(bp * fin_p * 4 + fin_p * fout_p * 2 + fout_p * 4
                            + bp * fout_p * 2 + nbt * 2 * fout_p * 4 + bp * 8)),
    )(x32, w_bf, b2)

    # ---- tiny glue: finish batch-norm statistics over the true batch size ---
    # One-pass sum / sum-of-squares in f32 (clamped); fine at these scales, a
    # centered per-tile two-pass form would be more robust for huge |mean|/std.
    sums = jnp.sum(partials, axis=0)                         # (2, fout_p)
    mean_bn = sums[0:1, :] * (1.0 / B)
    var_bn = jnp.maximum(
        (sums[1:2, :] - B * mean_bn * mean_bn) * (1.0 / (B - 1)), 0.0)

    # ========================================================================
    # Pass 2: switchable normalization + affine (LN stats precomputed in f32)
    # ========================================================================
    def pass2_kernel(mw_ref, vw_ref, y_ref, rs_ref, rsq_ref,
                     mbn_ref, vbn_ref, g_ref, bt_ref, o_ref):
        y = y_ref[...].astype(jnp.float32)
        mean_ln = rs_ref[...] * (1.0 / Fout)
        var_ln = jnp.maximum(
            (rsq_ref[...] - Fout * mean_ln * mean_ln) * (1.0 / (Fout - 1)), 0.0)
        mean = mw_ref[0] * mean_ln + mw_ref[1] * mbn_ref[...]
        var = vw_ref[0] * var_ln + vw_ref[1] * vbn_ref[...]
        o_ref[...] = ((y - mean) * jax.lax.rsqrt(var + EPS)) * g_ref[...] + bt_ref[...]

    smem = pl.BlockSpec(memory_space=pltpu.MemorySpace.SMEM)
    out_pad = pl.pallas_call(
        pass2_kernel,
        out_shape=jax.ShapeDtypeStruct((bp, fout_p), jnp.float32),
        grid=(nbt,),
        in_specs=[
            smem,                                                    # softmax(mean_weight), (2,)
            smem,                                                    # softmax(var_weight),  (2,)
            pl.BlockSpec((tb, fout_p), lambda i: (i, 0)),            # y tile (bf16)
            pl.BlockSpec((tb, 1), lambda i: (i, 0)),                 # LN row sums
            pl.BlockSpec((tb, 1), lambda i: (i, 0)),                 # LN row sums of squares
            pl.BlockSpec((1, fout_p), lambda i: (0, 0), pipeline_mode=resident),  # mean_bn
            pl.BlockSpec((1, fout_p), lambda i: (0, 0), pipeline_mode=resident),  # var_bn
            pl.BlockSpec((1, fout_p), lambda i: (0, 0), pipeline_mode=resident),  # gamma
            pl.BlockSpec((1, fout_p), lambda i: (0, 0), pipeline_mode=resident),  # beta
        ],
        out_specs=pl.BlockSpec((tb, fout_p), lambda i: (i, 0)),
        compiler_params=pltpu.CompilerParams(
            dimension_semantics=("parallel",),
            vmem_limit_bytes=vmem_limit),
        cost_estimate=pl.CostEstimate(
            flops=12 * bp * fout_p,
            transcendentals=bp * fout_p,
            bytes_accessed=bp * fout_p * (2 + 4) + 4 * fout_p * 4 + bp * 8),
    )(mw, vw, y_pad, rs, rsq, mean_bn, var_bn, gamma, beta)

    if bp == B and fout_p == Fout:
        return out_pad                    # no extra XLA slice round trip
    return out_pad[:B, :Fout]


def dense_block_ref(x, w, b, sn_weight, sn_bias, mean_weight, var_weight,
                    matmul_dtype=jnp.float32, quantize_y=False):
    """Pure-JAX reference mirroring the PyTorch forward.

    quantize_y=True mirrors the kernel's bf16 inter-pass intermediate: the
    statistics stay f32 but the normalization numerator uses bf16-rounded y.
    """
    y = jnp.dot(x.astype(matmul_dtype), jnp.transpose(w).astype(matmul_dtype),
                preferred_element_type=jnp.float32) + b.reshape(1, -1)
    y = jnp.where(y >= 0.0, y, LEAKY_SLOPE * y)
    B, F = y.shape
    mean_ln = jnp.mean(y, axis=1, keepdims=True)
    var_ln = jnp.var(y, axis=1, keepdims=True, ddof=1)
    mean_bn = jnp.mean(y, axis=0, keepdims=True)
    var_bn = jnp.var(y, axis=0, keepdims=True, ddof=1)
    mw = jax.nn.softmax(mean_weight.reshape(-1))
    vw = jax.nn.softmax(var_weight.reshape(-1))
    mean = mw[0] * mean_ln + mw[1] * mean_bn
    var = vw[0] * var_ln + vw[1] * var_bn
    if quantize_y:
        y = y.astype(jnp.bfloat16).astype(jnp.float32)
    x_hat = (y - mean) / jnp.sqrt(var + EPS)
    return x_hat * sn_weight.reshape(1, F) + sn_bias.reshape(1, F)


if __name__ == "__main__":
    # Small but representative: exercises batch padding/tiling (200 -> 2 tiles)
    # and feature padding (Fin 96 -> 128, Fout 160 -> 256).
    B, Fin, Fout = 200, 96, 160

    key = jax.random.PRNGKey(0)
    kx, kw, kb, kg, kbt = jax.random.split(key, 5)

    x = jax.random.normal(kx, (B, Fin), dtype=jnp.float32)

    bound = 1.0 / (Fin ** 0.5)
    w = jax.random.uniform(kw, (Fout, Fin), minval=-bound, maxval=bound,
                           dtype=jnp.float32)
    b = jax.random.uniform(kb, (Fout,), minval=-bound, maxval=bound,
                           dtype=jnp.float32)
    sn_weight = 1.0 + 0.1 * jax.random.normal(kg, (1, Fout), dtype=jnp.float32)
    sn_bias = 0.1 * jax.random.normal(kbt, (1, Fout), dtype=jnp.float32)
    mean_weight = jnp.array([0.3, 1.1], dtype=jnp.float32)
    var_weight = jnp.array([0.9, -0.4], dtype=jnp.float32)

    fwd = jax.jit(dense_block)
    out = fwd(x, w, b, sn_weight, sn_bias, mean_weight, var_weight)
    out = jax.block_until_ready(out)
    assert out.shape == (B, Fout)
    assert bool(jnp.all(jnp.isfinite(out)))

    # Matched-precision reference (bf16 matmul + bf16 intermediate y, f32 stats).
    ref_matched = dense_block_ref(x, w, b, sn_weight, sn_bias, mean_weight,
                                  var_weight, matmul_dtype=jnp.bfloat16,
                                  quantize_y=True)
    assert jnp.allclose(out, ref_matched, atol=5e-4, rtol=5e-4), \
        float(jnp.max(jnp.abs(out - ref_matched)))

    # Full-f32 reference (exact PyTorch semantics); looser tol for the bf16 path.
    ref_f32 = dense_block_ref(x, w, b, sn_weight, sn_bias, mean_weight, var_weight)
    assert jnp.allclose(out, ref_f32, atol=5e-2, rtol=5e-2), \
        float(jnp.max(jnp.abs(out - ref_f32)))

    print("KERNEL_OK")
</pallas_src>

<mosaic_0001>
module attributes {stable_mosaic.version = 11 : i64} {
  func.func @pass1_kernel(%arg0: i32, %arg1: memref<112x128xf32, #tpu.memory_space<vmem>>, %arg2: memref<128x256xbf16, #tpu.memory_space<vmem>>, %arg3: memref<1x256xf32, #tpu.memory_space<vmem>>, %arg4: memref<112x256xbf16, #tpu.memory_space<vmem>>, %arg5: memref<1x2x256xf32, #tpu.memory_space<vmem>>, %arg6: memref<112x1xf32, #tpu.memory_space<vmem>>, %arg7: memref<112x1xf32, #tpu.memory_space<vmem>>) attributes {dimension_semantics = [#tpu.dimension_semantics<parallel>], iteration_bounds = array<i64: 2>, scalar_prefetch = 0 : i64, scratch_operands = 0 : i64, tpu.core_type = #tpu.core_type<tc>, window_params = [{transform_indices = @transform_0, window_bounds = array<i64: 112, 128>}, {pipeline_mode = #tpu.pipeline_mode<synchronous>, transform_indices = @transform_1, window_bounds = array<i64: 128, 256>}, {pipeline_mode = #tpu.pipeline_mode<synchronous>, transform_indices = @transform_2, window_bounds = array<i64: 1, 256>}, {transform_indices = @transform_3, window_bounds = array<i64: 112, 256>}, {transform_indices = @transform_4, window_bounds = array<i64: 1, 2, 256>}, {transform_indices = @transform_5, window_bounds = array<i64: 112, 1>}, {transform_indices = @transform_6, window_bounds = array<i64: 112, 1>}]} {
    %c0 = arith.constant 0 : index
    %c0_0 = arith.constant 0 : index
    %0 = vector.load %arg1[%c0, %c0_0] : memref<112x128xf32, #tpu.memory_space<vmem>>, vector<112x128xf32>
    %1 = arith.truncf %0 : vector<112x128xf32> to vector<112x128xbf16>
    %c0_1 = arith.constant 0 : index
    %c0_2 = arith.constant 0 : index
    %2 = vector.load %arg2[%c0_1, %c0_2] : memref<128x256xbf16, #tpu.memory_space<vmem>>, vector<128x256xbf16>
    %cst = arith.constant dense<0.000000e+00> : vector<112x256xf32>
    %3 = tpu.matmul %1, %2, %cst {dimension_numbers = #tpu.dot_dimension_numbers<[1], [0], [0], [1], [0, 0, 1, 1], [], []>} : vector<112x128xbf16>, vector<128x256xbf16>, vector<112x256xf32> -> vector<112x256xf32>
    %c0_3 = arith.constant 0 : index
    %c0_4 = arith.constant 0 : index
    %4 = vector.load %arg3[%c0_3, %c0_4] : memref<1x256xf32, #tpu.memory_space<vmem>>, vector<1x256xf32>
    %5 = vector.broadcast %4 : vector<1x256xf32> to vector<112x256xf32>
    %6 = arith.addf %3, %5 : vector<112x256xf32>
    %cst_5 = arith.constant 0.00999999977 : f32
    %7 = vector.broadcast %cst_5 : f32 to vector<112x256xf32>
    %8 = arith.mulf %7, %6 : vector<112x256xf32>
    %9 = arith.maximumf %6, %8 : vector<112x256xf32>
    %10 = arith.truncf %9 : vector<112x256xf32> to vector<112x256xbf16>
    %c0_6 = arith.constant 0 : index
    %c0_7 = arith.constant 0 : index
    %11 = vector.load %arg4[%c0_6, %c0_7] : memref<112x256xbf16, #tpu.memory_space<vmem>>, vector<112x256xbf16>
    tpu.vector_store %arg4[%c0_6, %c0_7], %10 {strides = array<i32>} : memref<112x256xbf16, #tpu.memory_space<vmem>>, vector<112x256xbf16>,
    %cst_8 = arith.constant dense<0.000000e+00> : vector<112xf32>
    %12 = vector.multi_reduction <add>, %9, %cst_8 [1] : vector<112x256xf32> to vector<112xf32>
    %13 = vector.shape_cast %12 : vector<112xf32> to vector<112x1xf32>
    %c0_9 = arith.constant 0 : index
    %c0_10 = arith.constant 0 : index
    %14 = vector.load %arg6[%c0_9, %c0_10] : memref<112x1xf32, #tpu.memory_space<vmem>>, vector<112x1xf32>
    tpu.vector_store %arg6[%c0_9, %c0_10], %13 {strides = array<i32>} : memref<112x1xf32, #tpu.memory_space<vmem>>, vector<112x1xf32>,
    %15 = arith.mulf %9, %9 : vector<112x256xf32>
    %cst_11 = arith.constant dense<0.000000e+00> : vector<112xf32>
    %16 = vector.multi_reduction <add>, %15, %cst_11 [1] : vector<112x256xf32> to vector<112xf32>
    %17 = vector.shape_cast %16 : vector<112xf32> to vector<112x1xf32>
    %c0_12 = arith.constant 0 : index
    %c0_13 = arith.constant 0 : index
    %18 = vector.load %arg7[%c0_12, %c0_13] : memref<112x1xf32, #tpu.memory_space<vmem>>, vector<112x1xf32>
    tpu.vector_store %arg7[%c0_12, %c0_13], %17 {strides = array<i32>} : memref<112x1xf32, #tpu.memory_space<vmem>>, vector<112x1xf32>,
    %c112_i32 = arith.constant 112 : i32
    %19 = arith.muli %arg0, %c112_i32 : i32
    %20 = tpu.iota {dimensions = array<i32: 0>} : vector<112x256xi32>
    %21 = vector.broadcast %19 : i32 to vector<112x256xi32>
    %22 = arith.addi %21, %20 : vector<112x256xi32>
    %c200_i32 = arith.constant 200 : i32
    %23 = vector.broadcast %c200_i32 : i32 to vector<112x256xi32>
    %24 = arith.cmpi slt, %22, %23 : vector<112x256xi32>
    %cst_14 = arith.constant 0.000000e+00 : f32
    %25 = vector.broadcast %cst_14 : f32 to vector<112x256xf32>
    %26 = arith.select %24, %9, %25 : vector<112x256xi1>, vector<112x256xf32>
    %cst_15 = arith.constant dense<0.000000e+00> : vector<256xf32>
    %27 = vector.multi_reduction <add>, %26, %cst_15 [0] : vector<112x256xf32> to vector<256xf32>
    %28 = vector.shape_cast %27 : vector<256xf32> to vector<1x256xf32>
    %29 = arith.mulf %26, %26 : vector<112x256xf32>
    %cst_16 = arith.constant dense<0.000000e+00> : vector<256xf32>
    %30 = vector.multi_reduction <add>, %29, %cst_16 [0] : vector<112x256xf32> to vector<256xf32>
    %31 = vector.shape_cast %30 : vector<256xf32> to vector<1x256xf32>
    %32 = tpu.concatenate %28, %31 in 0 : vector<1x256xf32>, vector<1x256xf32> -> vector<2x256xf32>
    %33 = vector.shape_cast %32 : vector<2x256xf32> to vector<1x2x256xf32>
    %c0_17 = arith.constant 0 : index
    %c0_18 = arith.constant 0 : index
    %c0_19 = arith.constant 0 : index
    %34 = vector.load %arg5[%c0_17, %c0_18, %c0_19] : memref<1x2x256xf32, #tpu.memory_space<vmem>>, vector<1x2x256xf32>
    tpu.vector_store %arg5[%c0_17, %c0_18, %c0_19], %33 {strides = array<i32>} : memref<1x2x256xf32, #tpu.memory_space<vmem>>, vector<1x2x256xf32>,
    return
  }
  func.func @transform_0(%arg0: i32) -> (i32, i32) {
    %c0_i32 = arith.constant 0 : i32
    %c0_i32_0 = arith.constant 0 : i32
    return %arg0, %c0_i32 : i32, i32
  }
  func.func @transform_1(%arg0: i32) -> (i32, i32) {
    %c0_i32 = arith.constant 0 : i32
    %c0_i32_0 = arith.constant 0 : i32
    %c0_i32_1 = arith.constant 0 : i32
    return %c0_i32, %c0_i32_0 : i32, i32
  }
  func.func @transform_2(%arg0: i32) -> (i32, i32) {
    %c0_i32 = arith.constant 0 : i32
    %c0_i32_0 = arith.constant 0 : i32
    %c0_i32_1 = arith.constant 0 : i32
    return %c0_i32, %c0_i32_0 : i32, i32
  }
  func.func @transform_3(%arg0: i32) -> (i32, i32) {
    %c0_i32 = arith.constant 0 : i32
    %c0_i32_0 = arith.constant 0 : i32
    return %arg0, %c0_i32 : i32, i32
  }
  func.func @transform_4(%arg0: i32) -> (i32, i32, i32) {
    %c0_i32 = arith.constant 0 : i32
    %c0_i32_0 = arith.constant 0 : i32
    %c0_i32_1 = arith.constant 0 : i32
    return %arg0, %c0_i32, %c0_i32_0 : i32, i32, i32
  }
  func.func @transform_5(%arg0: i32) -> (i32, i32) {
    %c0_i32 = arith.constant 0 : i32
    %c0_i32_0 = arith.constant 0 : i32
    return %arg0, %c0_i32 : i32, i32
  }
  func.func @transform_6(%arg0: i32) -> (i32, i32) {
    %c0_i32 = arith.constant 0 : i32
    %c0_i32_0 = arith.constant 0 : i32
    return %arg0, %c0_i32 : i32, i32
  }
}

module attributes {stable_mosaic.version = 11 : i64} {
  func.func @pass2_kernel(%arg0: i32, %arg1: memref<2xf32, #tpu.memory_space<smem>>, %arg2: memref<2xf32, #tpu.memory_space<smem>>, %arg3: memref<112x256xbf16, #tpu.memory_space<vmem>>, %arg4: memref<112x1xf32, #tpu.memory_space<vmem>>, %arg5: memref<112x1xf32, #tpu.memory_space<vmem>>, %arg6: memref<1x256xf32, #tpu.memory_space<vmem>>, %arg7: memref<1x256xf32, #tpu.memory_space<vmem>>, %arg8: memref<1x256xf32, #tpu.memory_space<vmem>>, %arg9: memref<1x256xf32, #tpu.memory_space<vmem>>, %arg10: memref<112x256xf32, #tpu.memory_space<vmem>>) attributes {dimension_semantics = [#tpu.dimension_semantics<parallel>], iteration_bounds = array<i64: 2>, scalar_prefetch = 0 : i64, scratch_operands = 0 : i64, tpu.core_type = #tpu.core_type<tc>, window_params = [{transform_indices = @transform_0, window_bounds = array<i64: 2>}, {transform_indices = @transform_1, window_bounds = array<i64: 2>}, {transform_indices = @transform_2, window_bounds = array<i64: 112, 256>}, {transform_indices = @transform_3, window_bounds = array<i64: 112, 1>}, {transform_indices = @transform_4, window_bounds = array<i64: 112, 1>}, {pipeline_mode = #tpu.pipeline_mode<synchronous>, transform_indices = @transform_5, window_bounds = array<i64: 1, 256>}, {pipeline_mode = #tpu.pipeline_mode<synchronous>, transform_indices = @transform_6, window_bounds = array<i64: 1, 256>}, {pipeline_mode = #tpu.pipeline_mode<synchronous>, transform_indices = @transform_7, window_bounds = array<i64: 1, 256>}, {pipeline_mode = #tpu.pipeline_mode<synchronous>, transform_indices = @transform_8, window_bounds = array<i64: 1, 256>}, {transform_indices = @transform_9, window_bounds = array<i64: 112, 256>}]} {
    %c0 = arith.constant 0 : index
    %c0_0 = arith.constant 0 : index
    %0 = vector.load %arg3[%c0, %c0_0] : memref<112x256xbf16, #tpu.memory_space<vmem>>, vector<112x256xbf16>
    %1 = arith.extf %0 : vector<112x256xbf16> to vector<112x256xf32>
    %c0_1 = arith.constant 0 : index
    %c0_2 = arith.constant 0 : index
    %2 = vector.load %arg4[%c0_1, %c0_2] : memref<112x1xf32, #tpu.memory_space<vmem>>, vector<112x1xf32>
    %cst = arith.constant 6.250000e-03 : f32
    %3 = vector.broadcast %cst : f32 to vector<112x1xf32>
    %4 = arith.mulf %2, %3 : vector<112x1xf32>
    %c0_3 = arith.constant 0 : index
    %c0_4 = arith.constant 0 : index
    %5 = vector.load %arg5[%c0_3, %c0_4] : memref<112x1xf32, #tpu.memory_space<vmem>>, vector<112x1xf32>
    %cst_5 = arith.constant 1.600000e+02 : f32
    %6 = vector.broadcast %cst_5 : f32 to vector<112x1xf32>
    %7 = arith.mulf %6, %4 : vector<112x1xf32>
    %8 = arith.mulf %7, %4 : vector<112x1xf32>
    %9 = arith.subf %5, %8 : vector<112x1xf32>
    %cst_6 = arith.constant 0.00628930796 : f32
    %10 = vector.broadcast %cst_6 : f32 to vector<112x1xf32>
    %11 = arith.mulf %9, %10 : vector<112x1xf32>
    %cst_7 = arith.constant 0.000000e+00 : f32
    %12 = vector.broadcast %cst_7 : f32 to vector<112x1xf32>
    %13 = arith.maximumf %11, %12 : vector<112x1xf32>
    %c0_8 = arith.constant 0 : index
    %14 = memref.load %arg1[%c0_8] : memref<2xf32, #tpu.memory_space<smem>>
    %15 = vector.broadcast %14 : f32 to vector<112x1xf32>
    %16 = arith.mulf %15, %4 : vector<112x1xf32>
    %c1 = arith.constant 1 : index
    %17 = memref.load %arg1[%c1] : memref<2xf32, #tpu.memory_space<smem>>
    %c0_9 = arith.constant 0 : index
    %c0_10 = arith.constant 0 : index
    %18 = vector.load %arg6[%c0_9, %c0_10] : memref<1x256xf32, #tpu.memory_space<vmem>>, vector<1x256xf32>
    %19 = vector.broadcast %17 : f32 to vector<1x256xf32>
    %20 = arith.mulf %19, %18 : vector<1x256xf32>
    %21 = vector.broadcast %16 : vector<112x1xf32> to vector<112x256xf32>
    %22 = vector.broadcast %20 : vector<1x256xf32> to vector<112x256xf32>
    %23 = arith.addf %21, %22 : vector<112x256xf32>
    %c0_11 = arith.constant 0 : index
    %24 = memref.load %arg2[%c0_11] : memref<2xf32, #tpu.memory_space<smem>>
    %25 = vector.broadcast %24 : f32 to vector<112x1xf32>
    %26 = arith.mulf %25, %13 : vector<112x1xf32>
    %c1_12 = arith.constant 1 : index
    %27 = memref.load %arg2[%c1_12] : memref<2xf32, #tpu.memory_space<smem>>
    %c0_13 = arith.constant 0 : index
    %c0_14 = arith.constant 0 : index
    %28 = vector.load %arg7[%c0_13, %c0_14] : memref<1x256xf32, #tpu.memory_space<vmem>>, vector<1x256xf32>
    %29 = vector.broadcast %27 : f32 to vector<1x256xf32>
    %30 = arith.mulf %29, %28 : vector<1x256xf32>
    %31 = vector.broadcast %26 : vector<112x1xf32> to vector<112x256xf32>
    %32 = vector.broadcast %30 : vector<1x256xf32> to vector<112x256xf32>
    %33 = arith.addf %31, %32 : vector<112x256xf32>
    %34 = arith.subf %1, %23 : vector<112x256xf32>
    %cst_15 = arith.constant 9.99999974E-6 : f32
    %35 = vector.broadcast %cst_15 : f32 to vector<112x256xf32>
    %36 = arith.addf %33, %35 : vector<112x256xf32>
    %37 = math.rsqrt %36 : vector<112x256xf32>
    %38 = arith.mulf %34, %37 : vector<112x256xf32>
    %c0_16 = arith.constant 0 : index
    %c0_17 = arith.constant 0 : index
    %39 = vector.load %arg8[%c0_16, %c0_17] : memref<1x256xf32, #tpu.memory_space<vmem>>, vector<1x256xf32>
    %40 = vector.broadcast %39 : vector<1x256xf32> to vector<112x256xf32>
    %41 = arith.mulf %38, %40 : vector<112x256xf32>
    %c0_18 = arith.constant 0 : index
    %c0_19 = arith.constant 0 : index
    %42 = vector.load %arg9[%c0_18, %c0_19] : memref<1x256xf32, #tpu.memory_space<vmem>>, vector<1x256xf32>
    %43 = vector.broadcast %42 : vector<1x256xf32> to vector<112x256xf32>
    %44 = arith.addf %41, %43 : vector<112x256xf32>
    %c0_20 = arith.constant 0 : index
    %c0_21 = arith.constant 0 : index
    %45 = vector.load %arg10[%c0_20, %c0_21] : memref<112x256xf32, #tpu.memory_space<vmem>>, vector<112x256xf32>
    tpu.vector_store %arg10[%c0_20, %c0_21], %44 {strides = array<i32>} : memref<112x256xf32, #tpu.memory_space<vmem>>, vector<112x256xf32>,
    return
  }
  func.func @transform_0(%arg0: i32) -> i32 {
    %c0_i32 = arith.constant 0 : i32
    %c0_i32_0 = arith.constant 0 : i32
    return %c0_i32 : i32
  }
  func.func @transform_1(%arg0: i32) -> i32 {
    %c0_i32 = arith.constant 0 : i32
    %c0_i32_0 = arith.constant 0 : i32
    return %c0_i32 : i32
  }
  func.func @transform_2(%arg0: i32) -> (i32, i32) {
    %c0_i32 = arith.constant 0 : i32
    %c0_i32_0 = arith.constant 0 : i32
    return %arg0, %c0_i32 : i32, i32
  }
  func.func @transform_3(%arg0: i32) -> (i32, i32) {
    %c0_i32 = arith.constant 0 : i32
    %c0_i32_0 = arith.constant 0 : i32
    return %arg0, %c0_i32 : i32, i32
  }
  func.func @transform_4(%arg0: i32) -> (i32, i32) {
    %c0_i32 = arith.constant 0 : i32
    %c0_i32_0 = arith.constant 0 : i32
    return %arg0, %c0_i32 : i32, i32
  }
  func.func @transform_5(%arg0: i32) -> (i32, i32) {
    %c0_i32 = arith.constant 0 : i32
    %c0_i32_0 = arith.constant 0 : i32
    %c0_i32_1 = arith.constant 0 : i32
    return %c0_i32, %c0_i32_0 : i32, i32
  }
  func.func @transform_6(%arg0: i32) -> (i32, i32) {
    %c0_i32 = arith.constant 0 : i32
    %c0_i32_0 = arith.constant 0 : i32
    %c0_i32_1 = arith.constant 0 : i32
    return %c0_i32, %c0_i32_0 : i32, i32
  }
  func.func @transform_7(%arg0: i32) -> (i32, i32) {
    %c0_i32 = arith.constant 0 : i32
    %c0_i32_0 = arith.constant 0 : i32
    %c0_i32_1 = arith.constant 0 : i32
    return %c0_i32, %c0_i32_0 : i32, i32
  }
  func.func @transform_8(%arg0: i32) -> (i32, i32) {
    %c0_i32 = arith.constant 0 : i32
    %c0_i32_0 = arith.constant 0 : i32
    %c0_i32_1 = arith.constant 0 : i32
    return %c0_i32, %c0_i32_0 : i32, i32
  }
  func.func @transform_9(%arg0: i32) -> (i32, i32) {
    %c0_i32 = arith.constant 0 : i32
    %c0_i32_0 = arith.constant 0 : i32
    return %arg0, %c0_i32 : i32, i32
  }
}

</mosaic_0001>

<llo_original>
// kernel: dense_block.2
$region0: #{dense_block.2}
  #allocation0 [shape = 'u32[]', space=smem, size = 0x4, offset = 0x4, fixed_abs, tag = 'smem constant byte address 0x4 - core index']
  #allocation1 [shape = 'u32[144,128]{1,0:T(1,128)}', space=vmem, size = 0x12000, scoped, tag = 'internal scratch']
  %s0 = inlined_call_operand.vmem [shape: f32[224,128], index: 0, kind: input, shape index: {}]
  %s1 = inlined_call_operand.vmem [shape: bf16[128,256], index: 1, kind: input, shape index: {}]
  %s2 = inlined_call_operand.vmem [shape: f32[1,256], index: 2, kind: input, shape index: {}]
  %s3 = inlined_call_operand.vmem [shape: bf16[224,256], index: 3, kind: output, shape index: {0}]
  %s4 = inlined_call_operand.vmem [shape: f32[2,2,256], index: 4, kind: output, shape index: {1}]
  %s5 = inlined_call_operand.vmem [shape: f32[224,1], index: 5, kind: output, shape index: {2}]
  %s6 = inlined_call_operand.vmem [shape: f32[224,1], index: 6, kind: output, shape index: {3}]
  %7 = xla_tuple %s3, %s4, %s5, %s6
  %s8 = sld [smem:[#allocation0]]
  $region69: #{dense_block.2} parent=0
    _
  %s10 = ssub.s32 1, %s8
  %s11 = scalar_select 0, %s10, %s8
  loop: start=0, step=1, limit=4
  $region2: #{dense_block.2} parent=0 // loop_pre_header
    _
  $region3: #{dense_block.2} parent=0 // loop_header
    %s13 = sphi 0, %s17
    %p14 = scmp.ge.s32.totalorder %s13, 4
    %s23 = sphi 0, %s25
    %s26 = sphi 0, %s23
    %s27 = sphi 0, %s26
    %s43 = sphi 0, %s27
    %s47 = sphi 0, %s47
    %s49 = sphi 0, %s47
    %s50 = sphi 0, %s49
    %s64 = sphi 0, %s50
    %s68 = sphi 0, %s68
    %s70 = sphi 0, %s68
    %s71 = sphi 0, %s70
    %s85 = sphi 0, %s71
    %s91 = sphi 0, %s93
    %s94 = sphi 0, %s91
    %s95 = sphi 0, %s94
    %s111 = sphi 0, %s95
    %s117 = sphi 0, %s119
    %s120 = sphi 0, %s117
    %s121 = sphi 0, %s120
    %s137 = sphi 0, %s121
    %s143 = sphi 0, %s145
    %s146 = sphi 0, %s143
    %s147 = sphi 0, %s146
    %s163 = sphi 0, %s147
    %s169 = sphi 0, %s171
    %s172 = sphi 0, %s169
    %s173 = sphi 0, %s172
    %s189 = sphi 0, %s173
  $region4: #{dense_block.2} parent=0 // loop_header_branch
    %16 = sbr.rel (%p14) target = $region8
  $region5: #{dense_block.2} parent=0 // loop_body
    %s18 = ssub.s32 %s13, 1
    %s19 = ssub.s32 %s13, 2
    %s20 = sadd.s32 %s13, 1
    %s21 = ssub.s32 %s13, %s20
    %p22 = scmp.eq.s32.totalorder %s21, 0
    %s24 = sadd.s32 %s23, 1
    %s25 = scalar_select %p22, %s23, %s24
    %p28 = pneg %p22
    %p29 = scmp.eq.s32.totalorder %s13, 1
    %p30 = por %p28, %p29
    %p31 = scmp.ne.s32.totalorder %s23, %s26
    %p32 = scmp.eq.s32.totalorder %s13, 0
    %p33 = por %p31, %p32
    %p34 = scmp.ne.s32.totalorder %s23, %s26
    %p35 = scmp.eq.s32.totalorder %s18, 1
    %p36 = por %p34, %p35
    %p37 = scmp.ne.s32.totalorder %s26, %s27
    %p38 = scmp.eq.s32.totalorder %s18, 0
    %p39 = por %p37, %p38
    %p40 = scmp.ne.s32.totalorder %s26, %s27
    %p41 = scmp.eq.s32.totalorder %s19, 1
    %p42 = por %p40, %p41
    %p44 = scmp.ne.s32.totalorder %s27, %s43
    %p45 = scmp.eq.s32.totalorder %s19, 0
    %p46 = por %p44, %p45
    %s48 = sadd.s32 %s47, 1
    %p51 = scmp.eq.s32.totalorder %s13, 1
    %p52 = scmp.ne.s32.totalorder %s47, %s49
    %p53 = scmp.eq.s32.totalorder %s13, 0
    %p54 = por %p52, %p53
    %p55 = scmp.ne.s32.totalorder %s47, %s49
    %p56 = scmp.eq.s32.totalorder %s18, 1
    %p57 = por %p55, %p56
    %p58 = scmp.ne.s32.totalorder %s49, %s50
    %p59 = scmp.eq.s32.totalorder %s18, 0
    %p60 = por %p58, %p59
    %p61 = scmp.ne.s32.totalorder %s49, %s50
    %p62 = scmp.eq.s32.totalorder %s19, 1
    %p63 = por %p61, %p62
    %p65 = scmp.ne.s32.totalorder %s50, %s64
    %p66 = scmp.eq.s32.totalorder %s19, 0
    %p67 = por %p65, %p66
    %s69 = sadd.s32 %s68, 1
    %p72 = scmp.eq.s32.totalorder %s13, 1
    %p73 = scmp.ne.s32.totalorder %s68, %s70
    %p74 = scmp.eq.s32.totalorder %s13, 0
    %p75 = por %p73, %p74
    %p76 = scmp.ne.s32.totalorder %s68, %s70
    %p77 = scmp.eq.s32.totalorder %s18, 1
    %p78 = por %p76, %p77
    %p79 = scmp.ne.s32.totalorder %s70, %s71
    %p80 = scmp.eq.s32.totalorder %s18, 0
    %p81 = por %p79, %p80
    %p82 = scmp.ne.s32.totalorder %s70, %s71
    %p83 = scmp.eq.s32.totalorder %s19, 1
    %p84 = por %p82, %p83
    %p86 = scmp.ne.s32.totalorder %s71, %s85
    %p87 = scmp.eq.s32.totalorder %s19, 0
    %p88 = por %p86, %p87
    %s89 = ssub.s32 %s13, %s20
    %p90 = scmp.eq.s32.totalorder %s89, 0
    %s92 = sadd.s32 %s91, 1
    %s93 = scalar_select %p90, %s91, %s92
    %p96 = pneg %p90
    %p97 = scmp.eq.s32.totalorder %s13, 1
    %p98 = por %p96, %p97
    %p99 = scmp.ne.s32.totalorder %s91, %s94
    %p100 = scmp.eq.s32.totalorder %s13, 0
    %p101 = por %p99, %p100
    %p102 = scmp.ne.s32.totalorder %s91, %s94
    %p103 = scmp.eq.s32.totalorder %s18, 1
    %p104 = por %p102, %p103
    %p105 = scmp.ne.s32.totalorder %s94, %s95
    %p106 = scmp.eq.s32.totalorder %s18, 0
    %p107 = por %p105, %p106
    %p108 = scmp.ne.s32.totalorder %s94, %s95
    %p109 = scmp.eq.s32.totalorder %s19, 1
    %p110 = por %p108, %p109
    %p112 = scmp.ne.s32.totalorder %s95, %s111
    %p113 = scmp.eq.s32.totalorder %s19, 0
    %p114 = por %p112, %p113
    %s115 = ssub.s32 %s13, %s20
    %p116 = scmp.eq.s32.totalorder %s115, 0
    %s118 = sadd.s32 %s117, 1
    %s119 = scalar_select %p116, %s117, %s118
    %p122 = pneg %p116
    %p123 = scmp.eq.s32.totalorder %s13, 1
    %p124 = por %p122, %p123
    %p125 = scmp.ne.s32.totalorder %s117, %s120
    %p126 = scmp.eq.s32.totalorder %s13, 0
    %p127 = por %p125, %p126
    %p128 = scmp.ne.s32.totalorder %s117, %s120
    %p129 = scmp.eq.s32.totalorder %s18, 1
    %p130 = por %p128, %p129
    %p131 = scmp.ne.s32.totalorder %s120, %s121
    %p132 = scmp.eq.s32.totalorder %s18, 0
    %p133 = por %p131, %p132
    %p134 = scmp.ne.s32.totalorder %s120, %s121
    %p135 = scmp.eq.s32.totalorder %s19, 1
    %p136 = por %p134, %p135
    %p138 = scmp.ne.s32.totalorder %s121, %s137
    %p139 = scmp.eq.s32.totalorder %s19, 0
    %p140 = por %p138, %p139
    %s141 = ssub.s32 %s13, %s20
    %p142 = scmp.eq.s32.totalorder %s141, 0
    %s144 = sadd.s32 %s143, 1
    %s145 = scalar_select %p142, %s143, %s144
    %p148 = pneg %p142
    %p149 = scmp.eq.s32.totalorder %s13, 1
    %p150 = por %p148, %p149
    %p151 = scmp.ne.s32.totalorder %s143, %s146
    %p152 = scmp.eq.s32.totalorder %s13, 0
    %p153 = por %p151, %p152
    %p154 = scmp.ne.s32.totalorder %s143, %s146
    %p155 = scmp.eq.s32.totalorder %s18, 1
    %p156 = por %p154, %p155
    %p157 = scmp.ne.s32.totalorder %s146, %s147
    %p158 = scmp.eq.s32.totalorder %s18, 0
    %p159 = por %p157, %p158
    %p160 = scmp.ne.s32.totalorder %s146, %s147
    %p161 = scmp.eq.s32.totalorder %s19, 1
    %p162 = por %p160, %p161
    %p164 = scmp.ne.s32.totalorder %s147, %s163
    %p165 = scmp.eq.s32.totalorder %s19, 0
    %p166 = por %p164, %p165
    %s167 = ssub.s32 %s13, %s20
    %p168 = scmp.eq.s32.totalorder %s167, 0
    %s170 = sadd.s32 %s169, 1
    %s171 = scalar_select %p168, %s169, %s170
    %p174 = pneg %p168
    %p175 = scmp.eq.s32.totalorder %s13, 1
    %p176 = por %p174, %p175
    %p177 = scmp.ne.s32.totalorder %s169, %s172
    %p178 = scmp.eq.s32.totalorder %s13, 0
    %p179 = por %p177, %p178
    %p180 = scmp.ne.s32.totalorder %s169, %s172
    %p181 = scmp.eq.s32.totalorder %s18, 1
    %p182 = por %p180, %p181
    %p183 = scmp.ne.s32.totalorder %s172, %s173
    %p184 = scmp.eq.s32.totalorder %s18, 0
    %p185 = por %p183, %p184
    %p186 = scmp.ne.s32.totalorder %s172, %s173
    %p187 = scmp.eq.s32.totalorder %s19, 1
    %p188 = por %p186, %p187
    %p190 = scmp.ne.s32.totalorder %s173, %s189
    %p191 = scmp.eq.s32.totalorder %s19, 0
    %p192 = por %p190, %p191
    %p193 = scmp.le.s32.totalorder 1, %s13
    %p194 = scmp.lt.s32.totalorder %s13, 3
    %p195 = pnand %p193, %p194
    %p196 = pneg %p195
    // Predicated region
    $region9: #{dense_block.2} parent=5 // pred_check
      _
    $region10: #{dense_block.2} parent=5 // pred_check_branch
      %198 = sbr.rel (%p195) target = $region12
    $region11: #{dense_block.2} parent=5 // pred_region
      %s199 = ssub.s32 %s13, 1
      // Predicated region
      $region13: #{dense_block.2} parent=11 // pred_check
        %p200 = pneg %p60
      $region14: #{dense_block.2} parent=11 // pred_check_branch
        %202 = sbr.rel (%p200) target = $region16
      $region15: #{dense_block.2} parent=11 // pred_region
        _
      $region16: #{dense_block.2} parent=11 // pred_fallthru
        _
      // Predicated region
      $region17: #{dense_block.2} parent=11 // pred_check
        %p203 = pneg %p81
      $region18: #{dense_block.2} parent=11 // pred_check_branch
        %205 = sbr.rel (%p203) target = $region20
      $region19: #{dense_block.2} parent=11 // pred_region
        _
      $region20: #{dense_block.2} parent=11 // pred_fallthru
        _
    $region12: #{dense_block.2} parent=5 // pred_fallthru
      _
    %p206 = scmp.lt.s32.totalorder %s13, 2
    // Predicated region
    $region21: #{dense_block.2} parent=5 // pred_check
      %p207 = pneg %p206
    $region22: #{dense_block.2} parent=5 // pred_check_branch
      %209 = sbr.rel (%p207) target = $region24
    $region23: #{dense_block.2} parent=5 // pred_region
      // Predicated region
      $region25: #{dense_block.2} parent=23 // pred_check
        %p210 = pneg %p33
      $region26: #{dense_block.2} parent=23 // pred_check_branch
        %212 = sbr.rel (%p210) target = $region28
      $region27: #{dense_block.2} parent=23 // pred_region
        %s213 = smul.u32 14, %s13
        %p214 = scmp.lt.s32.totalorder %s213, 27
        %s215 = scalar_select %p214, %s213, 27
        %s216 = smul.addr %s215, 8
        %s217 = scalar_lea.vmem %s0, %s216
        %s218 = smul.u32 14, %s13
      $region28: #{dense_block.2} parent=23 // pred_fallthru
        _
    $region24: #{dense_block.2} parent=5 // pred_fallthru
      _
    %p219 = scmp.le.s32.totalorder 1, %s13
    %p220 = scmp.lt.s32.totalorder %s13, 3
    %p221 = pnand %p219, %p220
    %p222 = pneg %p221
    // Predicated region
    $region29: #{dense_block.2} parent=5 // pred_check
      _
    $region30: #{dense_block.2} parent=5 // pred_check_branch
      %224 = sbr.rel (%p221) target = $region32
    $region31: #{dense_block.2} parent=5 // pred_region
      %s225 = ssub.s32 %s13, 1
      %s226 = smul.u32 14, %s18
      %p227 = scmp.lt.s32.totalorder %s226, 27
      %s228 = scalar_select %p227, %s226, 27
      %s229 = smul.addr %s228, 8
      %s230 = scalar_lea.vmem %s0, %s229
      %p231 = pneg %p39
      %p232 = pneg %p36
      %p233 = pneg %p60
      %p234 = pneg %p57
      %p235 = pneg %p81
      %p236 = pneg %p78
      %p237 = pneg %p107
      %p238 = pneg %p104
      %s239 = smul.u32 14, %s18
      %p240 = scmp.lt.s32.totalorder %s239, 27
      %s241 = scalar_select %p240, %s239, 27
      %s242 = smul.addr %s241, 2
      %s243 = smul.addr %s242, 4
      %s244 = scalar_lea.vmem %s3, %s243
      %p245 = pneg %p133
      %p246 = pneg %p130
      %p247 = scmp.lt.s32.totalorder %s18, 1
      %s248 = scalar_select %p247, %s18, 1
      %s249 = smul.addr %s248, 2
      %s250 = smul.addr %s249, 2
      %s251 = scalar_lea.vmem %s4, %s250
      %p252 = pneg %p159
      %p253 = pneg %p156
      %s254 = smul.u32 14, %s18
      %p255 = scmp.lt.s32.totalorder %s254, 27
      %s256 = scalar_select %p255, %s254, 27
      %s257 = smul.addr %s256, 8
      %s258 = scalar_lea.vmem %s5, %s257
      %p259 = pneg %p185
      %p260 = pneg %p182
      %s261 = smul.u32 14, %s18
      %p262 = scmp.lt.s32.totalorder %s261, 27
      %s263 = scalar_select %p262, %s261, 27
      %s264 = smul.addr %s263, 8
      %s265 = scalar_lea.vmem %s6, %s264
      %s266 = smul.u32 14, %s18
      %p267 = scmp.lt.s32.totalorder %s266, 27
      %s268 = scalar_select %p267, %s266, 27
      %s269 = smul.addr %s268, 8
      %s270 = scalar_lea.vmem %s0, %s269
      %s271 = smul.u32 14, %s18
      %s272 = smul.u32 14, %s18
      %p273 = scmp.lt.s32.totalorder %s272, 27
      %s274 = scalar_select %p273, %s272, 27
      %s275 = smul.addr %s274, 2
      %s276 = smul.addr %s275, 4
      %s277 = scalar_lea.vmem %s3, %s276
      %s278 = smul.u32 14, %s18
      %p279 = scmp.lt.s32.totalorder %s18, 1
      %s280 = scalar_select %p279, %s18, 1
      %s281 = smul.addr %s280, 2
      %s282 = smul.addr %s281, 2
      %s283 = scalar_lea.vmem %s4, %s282
      %s284 = smul.u32 14, %s18
      %p285 = scmp.lt.s32.totalorder %s284, 27
      %s286 = scalar_select %p285, %s284, 27
      %s287 = smul.addr %s286, 8
      %s288 = scalar_lea.vmem %s5, %s287
      %s289 = smul.u32 14, %s18
      %s290 = smul.u32 14, %s18
      %p291 = scmp.lt.s32.totalorder %s290, 27
      %s292 = scalar_select %p291, %s290, 27
      %s293 = smul.addr %s292, 8
      %s294 = scalar_lea.vmem %s6, %s293
      %s295 = smul.u32 14, %s18
      %v297 = vld [vmem:[%s270] sm:$0xff]
      %v298 = vld [vmem:[%s270 + $0x8] sm:$0xff]
      %v299 = vld [vmem:[%s270 + $0x10] sm:$0xff]
      %v300 = vld [vmem:[%s270 + $0x18] sm:$0xff]
      %v301 = vld [vmem:[%s270 + $0x20] sm:$0xff]
      %v302 = vld [vmem:[%s270 + $0x28] sm:$0xff]
      %v303 = vld [vmem:[%s270 + $0x30] sm:$0xff]
      %v304 = vld [vmem:[%s270 + $0x38] sm:$0xff]
      %v305 = vld [vmem:[%s270 + $0x40] sm:$0xff]
      %v306 = vld [vmem:[%s270 + $0x48] sm:$0xff]
      %v307 = vld [vmem:[%s270 + $0x50] sm:$0xff]
      %v308 = vld [vmem:[%s270 + $0x58] sm:$0xff]
      %v309 = vld [vmem:[%s270 + $0x60] sm:$0xff]
      %v310 = vld [vmem:[%s270 + $0x68] sm:$0xff]
      %v311 = vpack.c.bf16 %v298, %v297
      %v312 = vpack.c.bf16 %v300, %v299
      %v313 = vpack.c.bf16 %v302, %v301
      %v314 = vpack.c.bf16 %v304, %v303
      %v315 = vpack.c.bf16 %v306, %v305
      %v316 = vpack.c.bf16 %v308, %v307
      %v317 = vpack.c.bf16 %v310, %v309
      %v318 = vld [vmem:[%s1] sm:$0xff]
      %v319 = vld [vmem:[%s1 + $0x8] sm:$0xff]
      %v320 = vld [vmem:[%s1 + $0x10] sm:$0xff]
      %v321 = vld [vmem:[%s1 + $0x18] sm:$0xff]
      %v322 = vld [vmem:[%s1 + $0x20] sm:$0xff]
      %v323 = vld [vmem:[%s1 + $0x28] sm:$0xff]
      %v324 = vld [vmem:[%s1 + $0x30] sm:$0xff]
      %v325 = vld [vmem:[%s1 + $0x38] sm:$0xff]
      %v326 = vld [vmem:[%s1 + $0x40] sm:$0xff]
      %v327 = vld [vmem:[%s1 + $0x48] sm:$0xff]
      %v328 = vld [vmem:[%s1 + $0x50] sm:$0xff]
      %v329 = vld [vmem:[%s1 + $0x58] sm:$0xff]
      %v330 = vld [vmem:[%s1 + $0x60] sm:$0xff]
      %v331 = vld [vmem:[%s1 + $0x68] sm:$0xff]
      %v332 = vld [vmem:[%s1 + $0x70] sm:$0xff]
      %v333 = vld [vmem:[%s1 + $0x78] sm:$0xff]
      %v334 = vld [vmem:[%s2] sm:$0x3]
      %v336 = vlaneseq
      %v337 = vshrl.u32 %v336, 7
      %v338 = vsub.s32 0, %v337
      %v339 = vrot.slane %v334, %v338
      %v340 = vlaneseq
      %v341 = vshrl.u32 %v340, 7
      %v342 = vsub.s32 1, %v341
      %v343 = vrot.slane %v334, %v342
      %v362 = vunpack.c.l.b16 %v318
      %v363 = vunpack.c.h.b16 %v318
      %v364 = vunpack.c.l.b16 %v319
      %v365 = vunpack.c.h.b16 %v319
      %v366 = vunpack.c.l.b16 %v320
      %v367 = vunpack.c.h.b16 %v320
      %v368 = vunpack.c.l.b16 %v321
      %v369 = vunpack.c.h.b16 %v321
      %v370 = vunpack.c.l.b16 %v322
      %v371 = vunpack.c.h.b16 %v322
      %v372 = vunpack.c.l.b16 %v323
      %v373 = vunpack.c.h.b16 %v323
      %v374 = vunpack.c.l.b16 %v324
      %v375 = vunpack.c.h.b16 %v324
      %v376 = vunpack.c.l.b16 %v325
      %v377 = vunpack.c.h.b16 %v325
      %v378 = vunpack.c.l.b16 %v326
      %v379 = vunpack.c.h.b16 %v326
      %v380 = vunpack.c.l.b16 %v327
      %v381 = vunpack.c.h.b16 %v327
      %v382 = vunpack.c.l.b16 %v328
      %v383 = vunpack.c.h.b16 %v328
      %v384 = vunpack.c.l.b16 %v329
      %v385 = vunpack.c.h.b16 %v329
      %v386 = vunpack.c.l.b16 %v330
      %v387 = vunpack.c.h.b16 %v330
      %v388 = vunpack.c.l.b16 %v331
      %v389 = vunpack.c.h.b16 %v331
      %v390 = vunpack.c.l.b16 %v332
      %v391 = vunpack.c.h.b16 %v332
      %v392 = vunpack.c.l.b16 %v333
      %v393 = vunpack.c.h.b16 %v333
      %v394 = vpack.c.b16 %v364, %v362
      %v395 = vpack.c.b16 %v365, %v363
      %v396 = vpack.c.b16 %v368, %v366
      %v397 = vpack.c.b16 %v369, %v367
      %v398 = vpack.c.b16 %v372, %v370
      %v399 = vpack.c.b16 %v373, %v371
      %v400 = vpack.c.b16 %v376, %v374
      %v401 = vpack.c.b16 %v377, %v375
      %v402 = vpack.c.b16 %v380, %v378
      %v403 = vpack.c.b16 %v381, %v379
      %v404 = vpack.c.b16 %v384, %v382
      %v405 = vpack.c.b16 %v385, %v383
      %v406 = vpack.c.b16 %v388, %v386
      %v407 = vpack.c.b16 %v389, %v387
      %v408 = vpack.c.b16 %v392, %v390
      %v409 = vpack.c.b16 %v393, %v391
      %426 = vmatprep.subr.bf16.mxu0 %v395
      %427 = vmatpush1.bf16.msra.mxu0 %v394
      %428 = vmatprep.subr.bf16.mxu0 %v397
      %429 = vmatpush1.bf16.msra.mxu0 %v396
      %430 = vmatprep.subr.bf16.mxu0 %v399
      %431 = vmatpush1.bf16.msra.mxu0 %v398
      %432 = vmatprep.subr.bf16.mxu0 %v401
      %433 = vmatpush1.bf16.msra.mxu0 %v400
      %434 = vmatprep.subr.bf16.mxu0 %v403
      %435 = vmatpush1.bf16.msra.mxu0 %v402
      %436 = vmatprep.subr.bf16.mxu0 %v405
      %437 = vmatpush1.bf16.msra.mxu0 %v404
      %438 = vmatprep.subr.bf16.mxu0 %v407
      %439 = vmatpush1.bf16.msra.mxu0 %v406
      %440 = vmatprep.subr.bf16.mxu0 %v409
      %441 = vmatpush1.bf16.msra.mxu0 %v408
      %442 = vmatprep.subr.bf16.mxu0 0
      %443 = vmatpush1.bf16.msra.mxu0 0
      %444 = vmatprep.subr.bf16.mxu0 0
      %445 = vmatpush1.bf16.msra.mxu0 0
      %446 = vmatprep.subr.bf16.mxu0 0
      %447 = vmatpush1.bf16.msra.mxu0 0
      %448 = vmatprep.subr.bf16.mxu0 0
      %449 = vmatpush1.bf16.msra.mxu0 0
      %450 = vmatprep.subr.bf16.mxu0 0
      %451 = vmatpush1.bf16.msra.mxu0 0
      %452 = vmatprep.subr.bf16.mxu0 0
      %453 = vmatpush1.bf16.msra.mxu0 0
      %454 = vmatprep.subr.bf16.mxu0 0
      %455 = vmatpush1.bf16.msra.mxu0 0
      %456 = vmatprep.subr.bf16.mxu0 0
      %457 = vmatpush1.bf16.msra.mxu0 0
      %458 = vmatprep.mubr.bf16.mxu0 0
      %459 = vmatmul.mubr.bf16.gmra.mrb[0].mxu0 %v311
      %v460 = vpop.f32.mrb[0].mxu0
      %v461 = vadd.f32 %v339, %v460
      %v462 = vpop.f32.mrb[0].mxu0
      %v463 = vadd.f32 %v343, %v462
      %v464 = vpop.f32.mrb[0].mxu0
      %v465 = vadd.f32 %v339, %v464
      %v466 = vpop.f32.mrb[0].mxu0
      %v467 = vadd.f32 %v343, %v466
      %468 = vmatprep.mubr.bf16.mxu0 0
      %469 = vmatmul.mubr.bf16.gmra.mrb[0].mxu0 %v312
      %v470 = vpop.f32.mrb[0].mxu0
      %v471 = vadd.f32 %v339, %v470
      %v472 = vpop.f32.mrb[0].mxu0
      %v473 = vadd.f32 %v343, %v472
      %v474 = vpop.f32.mrb[0].mxu0
      %v475 = vadd.f32 %v339, %v474
      %v476 = vpop.f32.mrb[0].mxu0
      %v477 = vadd.f32 %v343, %v476
      %478 = vmatprep.mubr.bf16.mxu0 0
      %479 = vmatmul.mubr.bf16.gmra.mrb[0].mxu0 %v313
      %v480 = vpop.f32.mrb[0].mxu0
      %v481 = vadd.f32 %v339, %v480
      %v482 = vpop.f32.mrb[0].mxu0
      %v483 = vadd.f32 %v343, %v482
      %v484 = vpop.f32.mrb[0].mxu0
      %v485 = vadd.f32 %v339, %v484
      %v486 = vpop.f32.mrb[0].mxu0
      %v487 = vadd.f32 %v343, %v486
      %488 = vmatprep.mubr.bf16.mxu0 0
      %489 = vmatmul.mubr.bf16.gmra.mrb[0].mxu0 %v314
      %v490 = vpop.f32.mrb[0].mxu0
      %v491 = vadd.f32 %v339, %v490
      %v492 = vpop.f32.mrb[0].mxu0
      %v493 = vadd.f32 %v343, %v492
      %v494 = vpop.f32.mrb[0].mxu0
      %v495 = vadd.f32 %v339, %v494
      %v496 = vpop.f32.mrb[0].mxu0
      %v497 = vadd.f32 %v343, %v496
      %498 = vmatprep.mubr.bf16.mxu0 0
      %499 = vmatmul.mubr.bf16.gmra.mrb[0].mxu0 %v315
      %v500 = vpop.f32.mrb[0].mxu0
      %v501 = vadd.f32 %v339, %v500
      %v502 = vpop.f32.mrb[0].mxu0
      %v503 = vadd.f32 %v343, %v502
      %v504 = vpop.f32.mrb[0].mxu0
      %v505 = vadd.f32 %v339, %v504
      %v506 = vpop.f32.mrb[0].mxu0
      %v507 = vadd.f32 %v343, %v506
      %508 = vmatprep.mubr.bf16.mxu0 0
      %509 = vmatmul.mubr.bf16.gmra.mrb[0].mxu0 %v316
      %v510 = vpop.f32.mrb[0].mxu0
      %v511 = vadd.f32 %v339, %v510
      %v512 = vpop.f32.mrb[0].mxu0
      %v513 = vadd.f32 %v343, %v512
      %v514 = vpop.f32.mrb[0].mxu0
      %v515 = vadd.f32 %v339, %v514
      %v516 = vpop.f32.mrb[0].mxu0
      %v517 = vadd.f32 %v343, %v516
      %518 = vmatprep.mubr.bf16.mxu0 0
      %519 = vmatmul.mubr.bf16.gmra.mrb[0].mxu0 %v317
      %v520 = vpop.f32.mrb[0].mxu0
      %v521 = vadd.f32 %v339, %v520
      %v522 = vpop.f32.mrb[0].mxu0
      %v523 = vadd.f32 %v343, %v522
      %v524 = vpop.f32.mrb[0].mxu0
      %v525 = vadd.f32 %v339, %v524
      %v526 = vpop.f32.mrb[0].mxu0
      %v527 = vadd.f32 %v343, %v526
      %528 = vdwg.mxu0
      %v529 = vmul.f32 %v461, 0.01
      %v530 = vmul.f32 %v463, 0.01
      %v531 = vmul.f32 %v465, 0.01
      %v532 = vmul.f32 %v467, 0.01
      %v533 = vmul.f32 %v471, 0.01
      %v534 = vmul.f32 %v473, 0.01
      %v535 = vmul.f32 %v475, 0.01
      %v536 = vmul.f32 %v477, 0.01
      %v537 = vmul.f32 %v481, 0.01
      %v538 = vmul.f32 %v483, 0.01
      %v539 = vmul.f32 %v485, 0.01
      %v540 = vmul.f32 %v487, 0.01
      %v541 = vmul.f32 %v491, 0.01
      %v542 = vmul.f32 %v493, 0.01
      %v543 = vmul.f32 %v495, 0.01
      %v544 = vmul.f32 %v497, 0.01
      %v545 = vmul.f32 %v501, 0.01
      %v546 = vmul.f32 %v503, 0.01
      %v547 = vmul.f32 %v505, 0.01
      %v548 = vmul.f32 %v507, 0.01
      %v549 = vmul.f32 %v511, 0.01
      %v550 = vmul.f32 %v513, 0.01
      %v551 = vmul.f32 %v515, 0.01
      %v552 = vmul.f32 %v517, 0.01
      %v553 = vmul.f32 %v521, 0.01
      %v554 = vmul.f32 %v523, 0.01
      %v555 = vmul.f32 %v525, 0.01
      %v556 = vmul.f32 %v527, 0.01
      %v557 = vmax.f32 %v461, %v529
      %v558 = vmax.f32 %v463, %v530
      %v559 = vmax.f32 %v465, %v531
      %v560 = vmax.f32 %v467, %v532
      %v561 = vmax.f32 %v471, %v533
      %v562 = vmax.f32 %v473, %v534
      %v563 = vmax.f32 %v475, %v535
      %v564 = vmax.f32 %v477, %v536
      %v565 = vmax.f32 %v481, %v537
      %v566 = vmax.f32 %v483, %v538
      %v567 = vmax.f32 %v485, %v539
      %v568 = vmax.f32 %v487, %v540
      %v569 = vmax.f32 %v491, %v541
      %v570 = vmax.f32 %v493, %v542
      %v571 = vmax.f32 %v495, %v543
      %v572 = vmax.f32 %v497, %v544
      %v573 = vmax.f32 %v501, %v545
      %v574 = vmax.f32 %v503, %v546
      %v575 = vmax.f32 %v505, %v547
      %v576 = vmax.f32 %v507, %v548
      %v577 = vmax.f32 %v511, %v549
      %v578 = vmax.f32 %v513, %v550
      %v579 = vmax.f32 %v515, %v551
      %v580 = vmax.f32 %v517, %v552
      %v581 = vmax.f32 %v521, %v553
      %v582 = vmax.f32 %v523, %v554
      %v583 = vmax.f32 %v525, %v555
      %v584 = vmax.f32 %v527, %v556
      %v585 = vpack.c.bf16 %v559, %v557
      %v586 = vpack.c.bf16 %v560, %v558
      %v587 = vpack.c.bf16 %v563, %v561
      %v588 = vpack.c.bf16 %v564, %v562
      %v589 = vpack.c.bf16 %v567, %v565
      %v590 = vpack.c.bf16 %v568, %v566
      %v591 = vpack.c.bf16 %v571, %v569
      %v592 = vpack.c.bf16 %v572, %v570
      %v593 = vpack.c.bf16 %v575, %v573
      %v594 = vpack.c.bf16 %v576, %v574
      %v595 = vpack.c.bf16 %v579, %v577
      %v596 = vpack.c.bf16 %v580, %v578
      %v597 = vpack.c.bf16 %v583, %v581
      %v598 = vpack.c.bf16 %v584, %v582
      %v613 = vunpack.c.l.b16 %v585
      %v614 = vunpack.c.l.b16 %v586
      %v615 = vunpack.c.h.b16 %v585
      %v616 = vunpack.c.h.b16 %v586
      %v617 = vunpack.c.l.b16 %v587
      %v618 = vunpack.c.l.b16 %v588
      %v619 = vunpack.c.h.b16 %v587
      %v620 = vunpack.c.h.b16 %v588
      %v621 = vunpack.c.l.b16 %v589
      %v622 = vunpack.c.l.b16 %v590
      %v623 = vunpack.c.h.b16 %v589
      %v624 = vunpack.c.h.b16 %v590
      %v625 = vunpack.c.l.b16 %v591
      %v626 = vunpack.c.l.b16 %v592
      %v627 = vunpack.c.h.b16 %v591
      %v628 = vunpack.c.h.b16 %v592
      %v629 = vunpack.c.l.b16 %v593
      %v630 = vunpack.c.l.b16 %v594
      %v631 = vunpack.c.h.b16 %v593
      %v632 = vunpack.c.h.b16 %v594
      %v633 = vunpack.c.l.b16 %v595
      %v634 = vunpack.c.l.b16 %v596
      %v635 = vunpack.c.h.b16 %v595
      %v636 = vunpack.c.h.b16 %v596
      %v637 = vunpack.c.l.b16 %v597
      %v638 = vunpack.c.l.b16 %v598
      %v639 = vunpack.c.h.b16 %v597
      %v640 = vunpack.c.h.b16 %v598
      %v641 = vpack.c.b16 %v614, %v613
      %v642 = vpack.c.b16 %v616, %v615
      %v643 = vpack.c.b16 %v618, %v617
      %v644 = vpack.c.b16 %v620, %v619
      %v645 = vpack.c.b16 %v622, %v621
      %v646 = vpack.c.b16 %v624, %v623
      %v647 = vpack.c.b16 %v626, %v625
      %v648 = vpack.c.b16 %v628, %v627
      %v649 = vpack.c.b16 %v630, %v629
      %v650 = vpack.c.b16 %v632, %v631
      %v651 = vpack.c.b16 %v634, %v633
      %v652 = vpack.c.b16 %v636, %v635
      %v653 = vpack.c.b16 %v638, %v637
      %v654 = vpack.c.b16 %v640, %v639
      %669 = vst [vmem:[%s277] sm:$0xff] %v641
      %670 = vst [vmem:[%s277 + $0x8] sm:$0xff] %v642
      %671 = vst [vmem:[%s277 + $0x10] sm:$0xff] %v643
      %672 = vst [vmem:[%s277 + $0x18] sm:$0xff] %v644
      %673 = vst [vmem:[%s277 + $0x20] sm:$0xff] %v645
      %674 = vst [vmem:[%s277 + $0x28] sm:$0xff] %v646
      %675 = vst [vmem:[%s277 + $0x30] sm:$0xff] %v647
      %676 = vst [vmem:[%s277 + $0x38] sm:$0xff] %v648
      %677 = vst [vmem:[%s277 + $0x40] sm:$0xff] %v649
      %678 = vst [vmem:[%s277 + $0x48] sm:$0xff] %v650
      %679 = vst [vmem:[%s277 + $0x50] sm:$0xff] %v651
      %680 = vst [vmem:[%s277 + $0x58] sm:$0xff] %v652
      %681 = vst [vmem:[%s277 + $0x60] sm:$0xff] %v653
      %682 = vst [vmem:[%s277 + $0x68] sm:$0xff] %v654
      %v683 = vadd.f32 %v557, %v558
      %684 = vadd.xlane.f32.xlu0 %v683
      %v685 = vpop.xlane.xlu0 %684
      %v686 = vadd.f32 %v559, %v560
      %687 = vadd.xlane.f32.xlu0 %v686
      %v688 = vpop.xlane.xlu0 %687
      %v689 = vadd.f32 %v561, %v562
      %690 = vadd.xlane.f32.xlu0 %v689
      %v691 = vpop.xlane.xlu0 %690
      %v692 = vadd.f32 %v563, %v564
      %693 = vadd.xlane.f32.xlu0 %v692
      %v694 = vpop.xlane.xlu0 %693
      %v695 = vadd.f32 %v565, %v566
      %696 = vadd.xlane.f32.xlu0 %v695
      %v697 = vpop.xlane.xlu0 %696
      %v698 = vadd.f32 %v567, %v568
      %699 = vadd.xlane.f32.xlu0 %v698
      %v700 = vpop.xlane.xlu0 %699
      %v701 = vadd.f32 %v569, %v570
      %702 = vadd.xlane.f32.xlu0 %v701
      %v703 = vpop.xlane.xlu0 %702
      %v704 = vadd.f32 %v571, %v572
      %705 = vadd.xlane.f32.xlu0 %v704
      %v706 = vpop.xlane.xlu0 %705
      %v707 = vadd.f32 %v573, %v574
      %708 = vadd.xlane.f32.xlu0 %v707
      %v709 = vpop.xlane.xlu0 %708
      %v710 = vadd.f32 %v575, %v576
      %711 = vadd.xlane.f32.xlu0 %v710
      %v712 = vpop.xlane.xlu0 %711
      %v713 = vadd.f32 %v577, %v578
      %714 = vadd.xlane.f32.xlu0 %v713
      %v715 = vpop.xlane.xlu0 %714
      %v716 = vadd.f32 %v579, %v580
      %717 = vadd.xlane.f32.xlu0 %v716
      %v718 = vpop.xlane.xlu0 %717
      %v719 = vadd.f32 %v581, %v582
      %720 = vadd.xlane.f32.xlu0 %v719
      %v721 = vpop.xlane.xlu0 %720
      %v722 = vadd.f32 %v583, %v584
      %723 = vadd.xlane.f32.xlu0 %v722
      %v724 = vpop.xlane.xlu0 %723
      %vm725 = vcmask 7168
      %726 = vst.msk [vmem:[%s288] sm:$0xff] %vm725, %v685
      %727 = vst.msk [vmem:[%s288 + $0x8] sm:$0xff] %vm725, %v688
      %728 = vst.msk [vmem:[%s288 + $0x10] sm:$0xff] %vm725, %v691
      %729 = vst.msk [vmem:[%s288 + $0x18] sm:$0xff] %vm725, %v694
      %730 = vst.msk [vmem:[%s288 + $0x20] sm:$0xff] %vm725, %v697
      %731 = vst.msk [vmem:[%s288 + $0x28] sm:$0xff] %vm725, %v700
      %732 = vst.msk [vmem:[%s288 + $0x30] sm:$0xff] %vm725, %v703
      %733 = vst.msk [vmem:[%s288 + $0x38] sm:$0xff] %vm725, %v706
      %734 = vst.msk [vmem:[%s288 + $0x40] sm:$0xff] %vm725, %v709
      %735 = vst.msk [vmem:[%s288 + $0x48] sm:$0xff] %vm725, %v712
      %736 = vst.msk [vmem:[%s288 + $0x50] sm:$0xff] %vm725, %v715
      %737 = vst.msk [vmem:[%s288 + $0x58] sm:$0xff] %vm725, %v718
      %738 = vst.msk [vmem:[%s288 + $0x60] sm:$0xff] %vm725, %v721
      %739 = vst.msk [vmem:[%s288 + $0x68] sm:$0xff] %vm725, %v724
      %v740 = vmul.f32 %v557, %v557
      %v741 = vmul.f32 %v558, %v558
      %v742 = vmul.f32 %v559, %v559
      %v743 = vmul.f32 %v560, %v560
      %v744 = vmul.f32 %v561, %v561
      %v745 = vmul.f32 %v562, %v562
      %v746 = vmul.f32 %v563, %v563
      %v747 = vmul.f32 %v564, %v564
      %v748 = vmul.f32 %v565, %v565
      %v749 = vmul.f32 %v566, %v566
      %v750 = vmul.f32 %v567, %v567
      %v751 = vmul.f32 %v568, %v568
      %v752 = vmul.f32 %v569, %v569
      %v753 = vmul.f32 %v570, %v570
      %v754 = vmul.f32 %v571, %v571
      %v755 = vmul.f32 %v572, %v572
      %v756 = vmul.f32 %v573, %v573
      %v757 = vmul.f32 %v574, %v574
      %v758 = vmul.f32 %v575, %v575
      %v759 = vmul.f32 %v576, %v576
      %v760 = vmul.f32 %v577, %v577
      %v761 = vmul.f32 %v578, %v578
      %v762 = vmul.f32 %v579, %v579
      %v763 = vmul.f32 %v580, %v580
      %v764 = vmul.f32 %v581, %v581
      %v765 = vmul.f32 %v582, %v582
      %v766 = vmul.f32 %v583, %v583
      %v767 = vmul.f32 %v584, %v584
      %v768 = vadd.f32 %v740, %v741
      %769 = vadd.xlane.f32.xlu0 %v768
      %v770 = vpop.xlane.xlu0 %769
      %v771 = vadd.f32 %v742, %v743
      %772 = vadd.xlane.f32.xlu0 %v771
      %v773 = vpop.xlane.xlu0 %772
      %v774 = vadd.f32 %v744, %v745
      %775 = vadd.xlane.f32.xlu0 %v774
      %v776 = vpop.xlane.xlu0 %775
      %v777 = vadd.f32 %v746, %v747
      %778 = vadd.xlane.f32.xlu0 %v777
      %v779 = vpop.xlane.xlu0 %778
      %v780 = vadd.f32 %v748, %v749
      %781 = vadd.xlane.f32.xlu0 %v780
      %v782 = vpop.xlane.xlu0 %781
      %v783 = vadd.f32 %v750, %v751
      %784 = vadd.xlane.f32.xlu0 %v783
      %v785 = vpop.xlane.xlu0 %784
      %v786 = vadd.f32 %v752, %v753
      %787 = vadd.xlane.f32.xlu0 %v786
      %v788 = vpop.xlane.xlu0 %787
      %v789 = vadd.f32 %v754, %v755
      %790 = vadd.xlane.f32.xlu0 %v789
      %v791 = vpop.xlane.xlu0 %790
      %v792 = vadd.f32 %v756, %v757
      %793 = vadd.xlane.f32.xlu0 %v792
      %v794 = vpop.xlane.xlu0 %793
      %v795 = vadd.f32 %v758, %v759
      %796 = vadd.xlane.f32.xlu0 %v795
      %v797 = vpop.xlane.xlu0 %796
      %v798 = vadd.f32 %v760, %v761
      %799 = vadd.xlane.f32.xlu0 %v798
      %v800 = vpop.xlane.xlu0 %799
      %v801 = vadd.f32 %v762, %v763
      %802 = vadd.xlane.f32.xlu0 %v801
      %v803 = vpop.xlane.xlu0 %802
      %v804 = vadd.f32 %v764, %v765
      %805 = vadd.xlane.f32.xlu0 %v804
      %v806 = vpop.xlane.xlu0 %805
      %v807 = vadd.f32 %v766, %v767
      %808 = vadd.xlane.f32.xlu0 %v807
      %v809 = vpop.xlane.xlu0 %808
      %810 = vst.msk [vmem:[%s294] sm:$0xff] %vm725, %v770
      %811 = vst.msk [vmem:[%s294 + $0x8] sm:$0xff] %vm725, %v773
      %812 = vst.msk [vmem:[%s294 + $0x10] sm:$0xff] %vm725, %v776
      %813 = vst.msk [vmem:[%s294 + $0x18] sm:$0xff] %vm725, %v779
      %814 = vst.msk [vmem:[%s294 + $0x20] sm:$0xff] %vm725, %v782
      %815 = vst.msk [vmem:[%s294 + $0x28] sm:$0xff] %vm725, %v785
      %816 = vst.msk [vmem:[%s294 + $0x30] sm:$0xff] %vm725, %v788
      %817 = vst.msk [vmem:[%s294 + $0x38] sm:$0xff] %vm725, %v791
      %818 = vst.msk [vmem:[%s294 + $0x40] sm:$0xff] %vm725, %v794
      %819 = vst.msk [vmem:[%s294 + $0x48] sm:$0xff] %vm725, %v797
      %820 = vst.msk [vmem:[%s294 + $0x50] sm:$0xff] %vm725, %v800
      %821 = vst.msk [vmem:[%s294 + $0x58] sm:$0xff] %vm725, %v803
      %822 = vst.msk [vmem:[%s294 + $0x60] sm:$0xff] %vm725, %v806
      %823 = vst.msk [vmem:[%s294 + $0x68] sm:$0xff] %vm725, %v809
      %s824 = smul.u32 %s18, 112
      %v825 = vlaneseq
      %v826 = vshrl.u32 %v825, 7
      %v827 = vadd.s32 %v826, 8
      %v828 = vadd.s32 %v826, 16
      %v829 = vadd.s32 %v826, 24
      %v830 = vadd.s32 %v826, 32
      %v831 = vadd.s32 %v826, 40
      %v832 = vadd.s32 %v826, 48
      %v833 = vadd.s32 %v826, 56
      %v834 = vadd.s32 %v826, 64
      %v835 = vadd.s32 %v826, 72
      %v836 = vadd.s32 %v826, 80
      %v837 = vadd.s32 %v826, 88
      %v838 = vadd.s32 %v826, 96
      %v839 = vadd.s32 %v826, 104
      %v840 = vstv %s824
      %v841 = vadd.s32 %v840, %v826
      %v842 = vadd.s32 %v840, %v827
      %v843 = vadd.s32 %v840, %v828
      %v844 = vadd.s32 %v840, %v829
      %v845 = vadd.s32 %v840, %v830
      %v846 = vadd.s32 %v840, %v831
      %v847 = vadd.s32 %v840, %v832
      %v848 = vadd.s32 %v840, %v833
      %v849 = vadd.s32 %v840, %v834
      %v850 = vadd.s32 %v840, %v835
      %v851 = vadd.s32 %v840, %v836
      %v852 = vadd.s32 %v840, %v837
      %v853 = vadd.s32 %v840, %v838
      %v854 = vadd.s32 %v840, %v839
      %vm855 = vcmp.lt.s32.totalorder %v841, 200
      %vm856 = vcmp.lt.s32.totalorder %v842, 200
      %vm857 = vcmp.lt.s32.totalorder %v843, 200
      %vm858 = vcmp.lt.s32.totalorder %v844, 200
      %vm859 = vcmp.lt.s32.totalorder %v845, 200
      %vm860 = vcmp.lt.s32.totalorder %v846, 200
      %vm861 = vcmp.lt.s32.totalorder %v847, 200
      %vm862 = vcmp.lt.s32.totalorder %v848, 200
      %vm863 = vcmp.lt.s32.totalorder %v849, 200
      %vm864 = vcmp.lt.s32.totalorder %v850, 200
      %vm865 = vcmp.lt.s32.totalorder %v851, 200
      %vm866 = vcmp.lt.s32.totalorder %v852, 200
      %vm867 = vcmp.lt.s32.totalorder %v853, 200
      %vm868 = vcmp.lt.s32.totalorder %v854, 200
      %v869 = vsel %vm855, %v557, 0.0
      %v870 = vsel %vm855, %v558, 0.0
      %v871 = vsel %vm856, %v559, 0.0
      %v872 = vsel %vm856, %v560, 0.0
      %v873 = vsel %vm857, %v561, 0.0
      %v874 = vsel %vm857, %v562, 0.0
      %v875 = vsel %vm858, %v563, 0.0
      %v876 = vsel %vm858, %v564, 0.0
      %v877 = vsel %vm859, %v565, 0.0
      %v878 = vsel %vm859, %v566, 0.0
      %v879 = vsel %vm860, %v567, 0.0
      %v880 = vsel %vm860, %v568, 0.0
      %v881 = vsel %vm861, %v569, 0.0
      %v882 = vsel %vm861, %v570, 0.0
      %v883 = vsel %vm862, %v571, 0.0
      %v884 = vsel %vm862, %v572, 0.0
      %v885 = vsel %vm863, %v573, 0.0
      %v886 = vsel %vm863, %v574, 0.0
      %v887 = vsel %vm864, %v575, 0.0
      %v888 = vsel %vm864, %v576, 0.0
      %v889 = vsel %vm865, %v577, 0.0
      %v890 = vsel %vm865, %v578, 0.0
      %v891 = vsel %vm866, %v579, 0.0
      %v892 = vsel %vm866, %v580, 0.0
      %v893 = vsel %vm867, %v581, 0.0
      %v894 = vsel %vm867, %v582, 0.0
      %v895 = vsel %vm868, %v583, 0.0
      %v896 = vsel %vm868, %v584, 0.0
      %v897 = vadd.f32 %v869, %v871
      %v898 = vadd.f32 %v897, %v873
      %v899 = vadd.f32 %v898, %v875
      %v900 = vadd.f32 %v899, %v877
      %v901 = vadd.f32 %v900, %v879
      %v902 = vadd.f32 %v901, %v881
      %v903 = vadd.f32 %v902, %v883
      %v904 = vadd.f32 %v903, %v885
      %v905 = vadd.f32 %v904, %v887
      %v906 = vadd.f32 %v905, %v889
      %v907 = vadd.f32 %v906, %v891
      %v908 = vadd.f32 %v907, %v893
      %v909 = vadd.f32 %v908, %v895
      %v910 = vrot.slane %v909, 4
      %v911 = vadd.f32 %v909, %v910
      %v912 = vrot.slane %v911, 2
      %v913 = vadd.f32 %v911, %v912
      %v914 = vrot.slane %v913, 1
      %v915 = vadd.f32 %v913, %v914
      %v916 = vadd.f32 %v870, %v872
      %v917 = vadd.f32 %v916, %v874
      %v918 = vadd.f32 %v917, %v876
      %v919 = vadd.f32 %v918, %v878
      %v920 = vadd.f32 %v919, %v880
      %v921 = vadd.f32 %v920, %v882
      %v922 = vadd.f32 %v921, %v884
      %v923 = vadd.f32 %v922, %v886
      %v924 = vadd.f32 %v923, %v888
      %v925 = vadd.f32 %v924, %v890
      %v926 = vadd.f32 %v925, %v892
      %v927 = vadd.f32 %v926, %v894
      %v928 = vadd.f32 %v927, %v896
      %v929 = vrot.slane %v928, 4
      %v930 = vadd.f32 %v928, %v929
      %v931 = vrot.slane %v930, 2
      %v932 = vadd.f32 %v930, %v931
      %v933 = vrot.slane %v932, 1
      %v934 = vadd.f32 %v932, %v933
      %v935 = vmul.f32 %v869, %v869
      %v936 = vmul.f32 %v870, %v870
      %v937 = vmul.f32 %v871, %v871
      %v938 = vmul.f32 %v872, %v872
      %v939 = vmul.f32 %v873, %v873
      %v940 = vmul.f32 %v874, %v874
      %v941 = vmul.f32 %v875, %v875
      %v942 = vmul.f32 %v876, %v876
      %v943 = vmul.f32 %v877, %v877
      %v944 = vmul.f32 %v878, %v878
      %v945 = vmul.f32 %v879, %v879
      %v946 = vmul.f32 %v880, %v880
      %v947 = vmul.f32 %v881, %v881
      %v948 = vmul.f32 %v882, %v882
      %v949 = vmul.f32 %v883, %v883
      %v950 = vmul.f32 %v884, %v884
      %v951 = vmul.f32 %v885, %v885
      %v952 = vmul.f32 %v886, %v886
      %v953 = vmul.f32 %v887, %v887
      %v954 = vmul.f32 %v888, %v888
      %v955 = vmul.f32 %v889, %v889
      %v956 = vmul.f32 %v890, %v890
      %v957 = vmul.f32 %v891, %v891
      %v958 = vmul.f32 %v892, %v892
      %v959 = vmul.f32 %v893, %v893
      %v960 = vmul.f32 %v894, %v894
      %v961 = vmul.f32 %v895, %v895
      %v962 = vmul.f32 %v896, %v896
      %v963 = vadd.f32 %v935, %v937
      %v964 = vadd.f32 %v963, %v939
      %v965 = vadd.f32 %v964, %v941
      %v966 = vadd.f32 %v965, %v943
      %v967 = vadd.f32 %v966, %v945
      %v968 = vadd.f32 %v967, %v947
      %v969 = vadd.f32 %v968, %v949
      %v970 = vadd.f32 %v969, %v951
      %v971 = vadd.f32 %v970, %v953
      %v972 = vadd.f32 %v971, %v955
      %v973 = vadd.f32 %v972, %v957
      %v974 = vadd.f32 %v973, %v959
      %v975 = vadd.f32 %v974, %v961
      %v976 = vrot.slane %v975, 4
      %v977 = vadd.f32 %v975, %v976
      %v978 = vrot.slane %v977, 2
      %v979 = vadd.f32 %v977, %v978
      %v980 = vrot.slane %v979, 1
      %v981 = vadd.f32 %v979, %v980
      %v982 = vadd.f32 %v936, %v938
      %v983 = vadd.f32 %v982, %v940
      %v984 = vadd.f32 %v983, %v942
      %v985 = vadd.f32 %v984, %v944
      %v986 = vadd.f32 %v985, %v946
      %v987 = vadd.f32 %v986, %v948
      %v988 = vadd.f32 %v987, %v950
      %v989 = vadd.f32 %v988, %v952
      %v990 = vadd.f32 %v989, %v954
      %v991 = vadd.f32 %v990, %v956
      %v992 = vadd.f32 %v991, %v958
      %v993 = vadd.f32 %v992, %v960
      %v994 = vadd.f32 %v993, %v962
      %v995 = vrot.slane %v994, 4
      %v996 = vadd.f32 %v994, %v995
      %v997 = vrot.slane %v996, 2
      %v998 = vadd.f32 %v996, %v997
      %v999 = vrot.slane %v998, 1
      %v1000 = vadd.f32 %v998, %v999
      %vm1001 = vcmask 1040384
      %v1002 = vsel %vm1001, %v915, %v981
      %v1003 = vsel %vm1001, %v934, %v1000
      %v1006 = vcombine.low %v1002, %v1003
      %v1008 = vunpack.c.l.s4 1983009808
      %v1009 = vunpack.c.0.s8 %v1008
      %v1010 = vlaneseq
      %v1011 = vshrl.u32 %v1010, 7
      %v1012 = vsub.s32 %v1009, %v1011
      %v1013 = vrot.slane %v1006, %v1012
      %1015 = vst [vmem:[%s283] sm:$0xf] %v1013
      %s1016 = smul.u32 14, %s18
      %p1017 = scmp.lt.s32.totalorder %s1016, 27
      %s1018 = scalar_select %p1017, %s1016, 27
      %s1019 = smul.addr %s1018, 2
      %s1020 = smul.addr %s1019, 4
      %s1021 = scalar_lea.vmem %s3, %s1020
      %p1022 = scmp.lt.s32.totalorder %s18, 1
      %s1023 = scalar_select %p1022, %s18, 1
      %s1024 = smul.addr %s1023, 2
      %s1025 = smul.addr %s1024, 2
      %s1026 = scalar_lea.vmem %s4, %s1025
      %s1027 = smul.u32 14, %s18
      %p1028 = scmp.lt.s32.totalorder %s1027, 27
      %s1029 = scalar_select %p1028, %s1027, 27
      %s1030 = smul.addr %s1029, 8
      %s1031 = scalar_lea.vmem %s5, %s1030
      %s1032 = smul.u32 14, %s18
      %p1033 = scmp.lt.s32.totalorder %s1032, 27
      %s1034 = scalar_select %p1033, %s1032, 27
      %s1035 = smul.addr %s1034, 8
      %s1036 = scalar_lea.vmem %s6, %s1035
      // Predicated region
      $region33: #{dense_block.2} parent=31 // pred_check
        %p1037 = pneg %p104
      $region34: #{dense_block.2} parent=31 // pred_check_branch
        %1039 = sbr.rel (%p1037) target = $region36
      $region35: #{dense_block.2} parent=31 // pred_region
        %s1040 = smul.u32 14, %s18
      $region36: #{dense_block.2} parent=31 // pred_fallthru
        _
      // Predicated region
      $region37: #{dense_block.2} parent=31 // pred_check
        %p1041 = pneg %p130
      $region38: #{dense_block.2} parent=31 // pred_check_branch
        %1043 = sbr.rel (%p1041) target = $region40
      $region39: #{dense_block.2} parent=31 // pred_region
        _
      $region40: #{dense_block.2} parent=31 // pred_fallthru
        _
      // Predicated region
      $region41: #{dense_block.2} parent=31 // pred_check
        %p1044 = pneg %p156
      $region42: #{dense_block.2} parent=31 // pred_check_branch
        %1046 = sbr.rel (%p1044) target = $region44
      $region43: #{dense_block.2} parent=31 // pred_region
        %s1047 = smul.u32 14, %s18
      $region44: #{dense_block.2} parent=31 // pred_fallthru
        _
      // Predicated region
      $region45: #{dense_block.2} parent=31 // pred_check
        %p1048 = pneg %p182
      $region46: #{dense_block.2} parent=31 // pred_check_branch
        %1050 = sbr.rel (%p1048) target = $region48
      $region47: #{dense_block.2} parent=31 // pred_region
        %s1051 = smul.u32 14, %s18
      $region48: #{dense_block.2} parent=31 // pred_fallthru
        _
    $region32: #{dense_block.2} parent=5 // pred_fallthru
      _
    %p1052 = scmp.le.s32.totalorder 2, %s13
    // Predicated region
    $region49: #{dense_block.2} parent=5 // pred_check
      %p1053 = pneg %p1052
    $region50: #{dense_block.2} parent=5 // pred_check_branch
      %1055 = sbr.rel (%p1053) target = $region52
    $region51: #{dense_block.2} parent=5 // pred_region
      %s1056 = ssub.s32 %s13, 2
      // Predicated region
      $region53: #{dense_block.2} parent=51 // pred_check
        %p1057 = pneg %p110
      $region54: #{dense_block.2} parent=51 // pred_check_branch
        %1059 = sbr.rel (%p1057) target = $region56
      $region55: #{dense_block.2} parent=51 // pred_region
        %s1060 = smul.u32 14, %s19
        %p1061 = scmp.lt.s32.totalorder %s1060, 27
        %s1062 = scalar_select %p1061, %s1060, 27
        %s1063 = smul.addr %s1062, 2
        %s1064 = smul.addr %s1063, 4
        %s1065 = scalar_lea.vmem %s3, %s1064
      $region56: #{dense_block.2} parent=51 // pred_fallthru
        _
      // Predicated region
      $region57: #{dense_block.2} parent=51 // pred_check
        %p1066 = pneg %p136
      $region58: #{dense_block.2} parent=51 // pred_check_branch
        %1068 = sbr.rel (%p1066) target = $region60
      $region59: #{dense_block.2} parent=51 // pred_region
        %p1069 = scmp.lt.s32.totalorder %s19, 1
        %s1070 = scalar_select %p1069, %s19, 1
        %s1071 = smul.addr %s1070, 2
        %s1072 = smul.addr %s1071, 2
        %s1073 = scalar_lea.vmem %s4, %s1072
      $region60: #{dense_block.2} parent=51 // pred_fallthru
        _
      // Predicated region
      $region61: #{dense_block.2} parent=51 // pred_check
        %p1074 = pneg %p162
      $region62: #{dense_block.2} parent=51 // pred_check_branch
        %1076 = sbr.rel (%p1074) target = $region64
      $region63: #{dense_block.2} parent=51 // pred_region
        %s1077 = smul.u32 14, %s19
        %p1078 = scmp.lt.s32.totalorder %s1077, 27
        %s1079 = scalar_select %p1078, %s1077, 27
        %s1080 = smul.addr %s1079, 8
        %s1081 = scalar_lea.vmem %s5, %s1080
      $region64: #{dense_block.2} parent=51 // pred_fallthru
        _
      // Predicated region
      $region65: #{dense_block.2} parent=51 // pred_check
        %p1082 = pneg %p188
      $region66: #{dense_block.2} parent=51 // pred_check_branch
        %1084 = sbr.rel (%p1082) target = $region68
      $region67: #{dense_block.2} parent=51 // pred_region
        %s1085 = smul.u32 14, %s19
        %p1086 = scmp.lt.s32.totalorder %s1085, 27
        %s1087 = scalar_select %p1086, %s1085, 27
        %s1088 = smul.addr %s1087, 8
        %s1089 = scalar_lea.vmem %s6, %s1088
      $region68: #{dense_block.2} parent=51 // pred_fallthru
        _
    $region52: #{dense_block.2} parent=5 // pred_fallthru
      _
  $region6: #{dense_block.2} parent=0 // loop_footer
    %s17 = sadd.s32 1, %s13
  $region7: #{dense_block.2} parent=0 // loop_footer_branch
    %12 = sbr.rel target = $region3
  $region8: #{dense_block.2} parent=0 // loop_exit
    _

// kernel: dense_block.3
$region0: #{dense_block.3}
  #allocation0 [shape = 'u32[]', space=smem, size = 0x4, offset = 0x4, fixed_abs, tag = 'smem constant byte address 0x4 - core index']
  #allocation1 [shape = 'u32[144,128]{1,0:T(1,128)}', space=vmem, size = 0x12000, scoped, tag = 'internal scratch']
  %s0 = inlined_call_operand.vmem [shape: f32[2], index: 0, kind: input, shape index: {}]
  %s1 = inlined_call_operand.vmem [shape: f32[2], index: 1, kind: input, shape index: {}]
  %s2 = inlined_call_operand.vmem [shape: bf16[224,256], index: 2, kind: input, shape index: {}]
  %s3 = inlined_call_operand.vmem [shape: f32[224,1], index: 3, kind: input, shape index: {}]
  %s4 = inlined_call_operand.vmem [shape: f32[224,1], index: 4, kind: input, shape index: {}]
  %s5 = inlined_call_operand.vmem [shape: f32[1,256], index: 5, kind: input, shape index: {}]
  %s6 = inlined_call_operand.vmem [shape: f32[1,256], index: 6, kind: input, shape index: {}]
  %s7 = inlined_call_operand.vmem [shape: f32[1,256], index: 7, kind: input, shape index: {}]
  %s8 = inlined_call_operand.vmem [shape: f32[1,256], index: 8, kind: input, shape index: {}]
  %s9 = inlined_call_operand.vmem [shape: f32[224,256], index: 9, kind: output, shape index: {}]
  %s10 = sld [smem:[#allocation0]]
  $region77: #{dense_block.3} parent=0
    _
  %s12 = ssub.s32 1, %s10
  %s13 = scalar_select 0, %s12, %s10
  $region1: #{dense_block.3} parent=0
    #allocation2 [shape = 'u8[512]{0}', space=smem, size = 0x200, scoped, tag = 'input window, operand 0, single buffered']
    #allocation3 [shape = 's32[2]{0}', space=sflag, size = 0x8, scoped, tag = 'scoped memory for dense_block.3']
    #allocation4 [shape = 'u8[512]{0}', space=smem, size = 0x200, scoped, tag = 'input window, operand 1, single buffered']
    #allocation5 [shape = 's32[1]{0}', space=sflag, size = 0x4, scoped, tag = 'scoped memory for dense_block.3']
    %14 = vsyncpa [#allocation3], 0
    %15 = vsyncpa [#allocation5], 0
    loop: start=0, step=1, limit=4
    $region2: #{dense_block.3} parent=1 // loop_pre_header
      _
    $region3: #{dense_block.3} parent=1 // loop_header
      %s17 = sphi 0, %s21
      %p18 = scmp.ge.s32.totalorder %s17, 4
      %s25 = sphi 0, %s25
      %s27 = sphi 0, %s25
      %s28 = sphi 0, %s27
      %s42 = sphi 0, %s28
      %s46 = sphi 0, %s46
      %s48 = sphi 0, %s46
      %s49 = sphi 0, %s48
      %s63 = sphi 0, %s49
      %s69 = sphi 0, %s71
      %s72 = sphi 0, %s69
      %s73 = sphi 0, %s72
      %s89 = sphi 0, %s73
      %s95 = sphi 0, %s97
      %s98 = sphi 0, %s95
      %s99 = sphi 0, %s98
      %s115 = sphi 0, %s99
      %s121 = sphi 0, %s123
      %s124 = sphi 0, %s121
      %s125 = sphi 0, %s124
      %s141 = sphi 0, %s125
      %s145 = sphi 0, %s145
      %s147 = sphi 0, %s145
      %s148 = sphi 0, %s147
      %s162 = sphi 0, %s148
      %s166 = sphi 0, %s166
      %s168 = sphi 0, %s166
      %s169 = sphi 0, %s168
      %s183 = sphi 0, %s169
      %s187 = sphi 0, %s187
      %s189 = sphi 0, %s187
      %s190 = sphi 0, %s189
      %s204 = sphi 0, %s190
      %s208 = sphi 0, %s208
      %s210 = sphi 0, %s208
      %s211 = sphi 0, %s210
      %s225 = sphi 0, %s211
      %s231 = sphi 0, %s233
      %s234 = sphi 0, %s231
      %s235 = sphi 0, %s234
      %s251 = sphi 0, %s235
    $region4: #{dense_block.3} parent=1 // loop_header_branch
      %20 = sbr.rel (%p18) target = $region8
    $region5: #{dense_block.3} parent=1 // loop_body
      %s22 = ssub.s32 %s17, 1
      %s23 = ssub.s32 %s17, 2
      %s24 = sadd.s32 %s17, 1
      %s26 = sadd.s32 %s25, 1
      %p29 = scmp.eq.s32.totalorder %s17, 1
      %p30 = scmp.ne.s32.totalorder %s25, %s27
      %p31 = scmp.eq.s32.totalorder %s17, 0
      %p32 = por %p30, %p31
      %p33 = scmp.ne.s32.totalorder %s25, %s27
      %p34 = scmp.eq.s32.totalorder %s22, 1
      %p35 = por %p33, %p34
      %p36 = scmp.ne.s32.totalorder %s27, %s28
      %p37 = scmp.eq.s32.totalorder %s22, 0
      %p38 = por %p36, %p37
      %p39 = scmp.ne.s32.totalorder %s27, %s28
      %p40 = scmp.eq.s32.totalorder %s23, 1
      %p41 = por %p39, %p40
      %p43 = scmp.ne.s32.totalorder %s28, %s42
      %p44 = scmp.eq.s32.totalorder %s23, 0
      %p45 = por %p43, %p44
      %s47 = sadd.s32 %s46, 1
      %p50 = scmp.eq.s32.totalorder %s17, 1
      %p51 = scmp.ne.s32.totalorder %s46, %s48
      %p52 = scmp.eq.s32.totalorder %s17, 0
      %p53 = por %p51, %p52
      %p54 = scmp.ne.s32.totalorder %s46, %s48
      %p55 = scmp.eq.s32.totalorder %s22, 1
      %p56 = por %p54, %p55
      %p57 = scmp.ne.s32.totalorder %s48, %s49
      %p58 = scmp.eq.s32.totalorder %s22, 0
      %p59 = por %p57, %p58
      %p60 = scmp.ne.s32.totalorder %s48, %s49
      %p61 = scmp.eq.s32.totalorder %s23, 1
      %p62 = por %p60, %p61
      %p64 = scmp.ne.s32.totalorder %s49, %s63
      %p65 = scmp.eq.s32.totalorder %s23, 0
      %p66 = por %p64, %p65
      %s67 = ssub.s32 %s17, %s24
      %p68 = scmp.eq.s32.totalorder %s67, 0
      %s70 = sadd.s32 %s69, 1
      %s71 = scalar_select %p68, %s69, %s70
      %p74 = pneg %p68
      %p75 = scmp.eq.s32.totalorder %s17, 1
      %p76 = por %p74, %p75
      %p77 = scmp.ne.s32.totalorder %s69, %s72
      %p78 = scmp.eq.s32.totalorder %s17, 0
      %p79 = por %p77, %p78
      %p80 = scmp.ne.s32.totalorder %s69, %s72
      %p81 = scmp.eq.s32.totalorder %s22, 1
      %p82 = por %p80, %p81
      %p83 = scmp.ne.s32.totalorder %s72, %s73
      %p84 = scmp.eq.s32.totalorder %s22, 0
      %p85 = por %p83, %p84
      %p86 = scmp.ne.s32.totalorder %s72, %s73
      %p87 = scmp.eq.s32.totalorder %s23, 1
      %p88 = por %p86, %p87
      %p90 = scmp.ne.s32.totalorder %s73, %s89
      %p91 = scmp.eq.s32.totalorder %s23, 0
      %p92 = por %p90, %p91
      %s93 = ssub.s32 %s17, %s24
      %p94 = scmp.eq.s32.totalorder %s93, 0
      %s96 = sadd.s32 %s95, 1
      %s97 = scalar_select %p94, %s95, %s96
      %p100 = pneg %p94
      %p101 = scmp.eq.s32.totalorder %s17, 1
      %p102 = por %p100, %p101
      %p103 = scmp.ne.s32.totalorder %s95, %s98
      %p104 = scmp.eq.s32.totalorder %s17, 0
      %p105 = por %p103, %p104
      %p106 = scmp.ne.s32.totalorder %s95, %s98
      %p107 = scmp.eq.s32.totalorder %s22, 1
      %p108 = por %p106, %p107
      %p109 = scmp.ne.s32.totalorder %s98, %s99
      %p110 = scmp.eq.s32.totalorder %s22, 0
      %p111 = por %p109, %p110
      %p112 = scmp.ne.s32.totalorder %s98, %s99
      %p113 = scmp.eq.s32.totalorder %s23, 1
      %p114 = por %p112, %p113
      %p116 = scmp.ne.s32.totalorder %s99, %s115
      %p117 = scmp.eq.s32.totalorder %s23, 0
      %p118 = por %p116, %p117
      %s119 = ssub.s32 %s17, %s24
      %p120 = scmp.eq.s32.totalorder %s119, 0
      %s122 = sadd.s32 %s121, 1
      %s123 = scalar_select %p120, %s121, %s122
      %p126 = pneg %p120
      %p127 = scmp.eq.s32.totalorder %s17, 1
      %p128 = por %p126, %p127
      %p129 = scmp.ne.s32.totalorder %s121, %s124
      %p130 = scmp.eq.s32.totalorder %s17, 0
      %p131 = por %p129, %p130
      %p132 = scmp.ne.s32.totalorder %s121, %s124
      %p133 = scmp.eq.s32.totalorder %s22, 1
      %p134 = por %p132, %p133
      %p135 = scmp.ne.s32.totalorder %s124, %s125
      %p136 = scmp.eq.s32.totalorder %s22, 0
      %p137 = por %p135, %p136
      %p138 = scmp.ne.s32.totalorder %s124, %s125
      %p139 = scmp.eq.s32.totalorder %s23, 1
      %p140 = por %p138, %p139
      %p142 = scmp.ne.s32.totalorder %s125, %s141
      %p143 = scmp.eq.s32.totalorder %s23, 0
      %p144 = por %p142, %p143
      %s146 = sadd.s32 %s145, 1
      %p149 = scmp.eq.s32.totalorder %s17, 1
      %p150 = scmp.ne.s32.totalorder %s145, %s147
      %p151 = scmp.eq.s32.totalorder %s17, 0
      %p152 = por %p150, %p151
      %p153 = scmp.ne.s32.totalorder %s145, %s147
      %p154 = scmp.eq.s32.totalorder %s22, 1
      %p155 = por %p153, %p154
      %p156 = scmp.ne.s32.totalorder %s147, %s148
      %p157 = scmp.eq.s32.totalorder %s22, 0
      %p158 = por %p156, %p157
      %p159 = scmp.ne.s32.totalorder %s147, %s148
      %p160 = scmp.eq.s32.totalorder %s23, 1
      %p161 = por %p159, %p160
      %p163 = scmp.ne.s32.totalorder %s148, %s162
      %p164 = scmp.eq.s32.totalorder %s23, 0
      %p165 = por %p163, %p164
      %s167 = sadd.s32 %s166, 1
      %p170 = scmp.eq.s32.totalorder %s17, 1
      %p171 = scmp.ne.s32.totalorder %s166, %s168
      %p172 = scmp.eq.s32.totalorder %s17, 0
      %p173 = por %p171, %p172
      %p174 = scmp.ne.s32.totalorder %s166, %s168
      %p175 = scmp.eq.s32.totalorder %s22, 1
      %p176 = por %p174, %p175
      %p177 = scmp.ne.s32.totalorder %s168, %s169
      %p178 = scmp.eq.s32.totalorder %s22, 0
      %p179 = por %p177, %p178
      %p180 = scmp.ne.s32.totalorder %s168, %s169
      %p181 = scmp.eq.s32.totalorder %s23, 1
      %p182 = por %p180, %p181
      %p184 = scmp.ne.s32.totalorder %s169, %s183
      %p185 = scmp.eq.s32.totalorder %s23, 0
      %p186 = por %p184, %p185
      %s188 = sadd.s32 %s187, 1
      %p191 = scmp.eq.s32.totalorder %s17, 1
      %p192 = scmp.ne.s32.totalorder %s187, %s189
      %p193 = scmp.eq.s32.totalorder %s17, 0
      %p194 = por %p192, %p193
      %p195 = scmp.ne.s32.totalorder %s187, %s189
      %p196 = scmp.eq.s32.totalorder %s22, 1
      %p197 = por %p195, %p196
      %p198 = scmp.ne.s32.totalorder %s189, %s190
      %p199 = scmp.eq.s32.totalorder %s22, 0
      %p200 = por %p198, %p199
      %p201 = scmp.ne.s32.totalorder %s189, %s190
      %p202 = scmp.eq.s32.totalorder %s23, 1
      %p203 = por %p201, %p202
      %p205 = scmp.ne.s32.totalorder %s190, %s204
      %p206 = scmp.eq.s32.totalorder %s23, 0
      %p207 = por %p205, %p206
      %s209 = sadd.s32 %s208, 1
      %p212 = scmp.eq.s32.totalorder %s17, 1
      %p213 = scmp.ne.s32.totalorder %s208, %s210
      %p214 = scmp.eq.s32.totalorder %s17, 0
      %p215 = por %p213, %p214
      %p216 = scmp.ne.s32.totalorder %s208, %s210
      %p217 = scmp.eq.s32.totalorder %s22, 1
      %p218 = por %p216, %p217
      %p219 = scmp.ne.s32.totalorder %s210, %s211
      %p220 = scmp.eq.s32.totalorder %s22, 0
      %p221 = por %p219, %p220
      %p222 = scmp.ne.s32.totalorder %s210, %s211
      %p223 = scmp.eq.s32.totalorder %s23, 1
      %p224 = por %p222, %p223
      %p226 = scmp.ne.s32.totalorder %s211, %s225
      %p227 = scmp.eq.s32.totalorder %s23, 0
      %p228 = por %p226, %p227
      %s229 = ssub.s32 %s17, %s24
      %p230 = scmp.eq.s32.totalorder %s229, 0
      %s232 = sadd.s32 %s231, 1
      %s233 = scalar_select %p230, %s231, %s232
      %p236 = pneg %p230
      %p237 = scmp.eq.s32.totalorder %s17, 1
      %p238 = por %p236, %p237
      %p239 = scmp.ne.s32.totalorder %s231, %s234
      %p240 = scmp.eq.s32.totalorder %s17, 0
      %p241 = por %p239, %p240
      %p242 = scmp.ne.s32.totalorder %s231, %s234
      %p243 = scmp.eq.s32.totalorder %s22, 1
      %p244 = por %p242, %p243
      %p245 = scmp.ne.s32.totalorder %s234, %s235
      %p246 = scmp.eq.s32.totalorder %s22, 0
      %p247 = por %p245, %p246
      %p248 = scmp.ne.s32.totalorder %s234, %s235
      %p249 = scmp.eq.s32.totalorder %s23, 1
      %p250 = por %p248, %p249
      %p252 = scmp.ne.s32.totalorder %s235, %s251
      %p253 = scmp.eq.s32.totalorder %s23, 0
      %p254 = por %p252, %p253
      %p255 = scmp.le.s32.totalorder 1, %s17
      %p256 = scmp.lt.s32.totalorder %s17, 3
      %p257 = pnand %p255, %p256
      %p258 = pneg %p257
      // Predicated region
      $region9: #{dense_block.3} parent=5 // pred_check
        _
      $region10: #{dense_block.3} parent=5 // pred_check_branch
        %260 = sbr.rel (%p257) target = $region12
      $region11: #{dense_block.3} parent=5 // pred_region
        %s261 = ssub.s32 %s17, 1
        // Predicated region
        $region13: #{dense_block.3} parent=11 // pred_check
          %p262 = pneg %p38
        $region14: #{dense_block.3} parent=11 // pred_check_branch
          %264 = sbr.rel (%p262) target = $region16
        $region15: #{dense_block.3} parent=11 // pred_region
          %s266 = ssub.s32 16, 16
          %267 = vsyncadd [#allocation3], %s266
          %s269 = sshll.u32 %s0, 4
          %s270 = int_to_ptr.vmem [resolvable:$true] %s269
          %272 = dma.vmem_to_smem %s270, 16, [#allocation2], [#allocation3]
        $region16: #{dense_block.3} parent=11 // pred_fallthru
          _
        // Predicated region
        $region17: #{dense_block.3} parent=11 // pred_check
          %p273 = pneg %p59
        $region18: #{dense_block.3} parent=11 // pred_check_branch
          %275 = sbr.rel (%p273) target = $region20
        $region19: #{dense_block.3} parent=11 // pred_region
          %s277 = ssub.s32 16, 16
          %278 = vsyncadd [#allocation5], %s277
          %s280 = sshll.u32 %s1, 4
          %s281 = int_to_ptr.vmem [resolvable:$true] %s280
          %283 = dma.vmem_to_smem %s281, 16, [#allocation4], [#allocation5]
        $region20: #{dense_block.3} parent=11 // pred_fallthru
          _
        // Predicated region
        $region21: #{dense_block.3} parent=11 // pred_check
          %p284 = pneg %p158
        $region22: #{dense_block.3} parent=11 // pred_check_branch
          %286 = sbr.rel (%p284) target = $region24
        $region23: #{dense_block.3} parent=11 // pred_region
          _
        $region24: #{dense_block.3} parent=11 // pred_fallthru
          _
        // Predicated region
        $region25: #{dense_block.3} parent=11 // pred_check
          %p287 = pneg %p179
        $region26: #{dense_block.3} parent=11 // pred_check_branch
          %289 = sbr.rel (%p287) target = $region28
        $region27: #{dense_block.3} parent=11 // pred_region
          _
        $region28: #{dense_block.3} parent=11 // pred_fallthru
          _
        // Predicated region
        $region29: #{dense_block.3} parent=11 // pred_check
          %p290 = pneg %p200
        $region30: #{dense_block.3} parent=11 // pred_check_branch
          %292 = sbr.rel (%p290) target = $region32
        $region31: #{dense_block.3} parent=11 // pred_region
          _
        $region32: #{dense_block.3} parent=11 // pred_fallthru
          _
        // Predicated region
        $region33: #{dense_block.3} parent=11 // pred_check
          %p293 = pneg %p221
        $region34: #{dense_block.3} parent=11 // pred_check_branch
          %295 = sbr.rel (%p293) target = $region36
        $region35: #{dense_block.3} parent=11 // pred_region
          _
        $region36: #{dense_block.3} parent=11 // pred_fallthru
          _
      $region12: #{dense_block.3} parent=5 // pred_fallthru
        _
      %p296 = scmp.lt.s32.totalorder %s17, 2
      // Predicated region
      $region37: #{dense_block.3} parent=5 // pred_check
        %p297 = pneg %p296
      $region38: #{dense_block.3} parent=5 // pred_check_branch
        %299 = sbr.rel (%p297) target = $region40
      $region39: #{dense_block.3} parent=5 // pred_region
        // Predicated region
        $region41: #{dense_block.3} parent=39 // pred_check
          %p300 = pneg %p79
        $region42: #{dense_block.3} parent=39 // pred_check_branch
          %302 = sbr.rel (%p300) target = $region44
        $region43: #{dense_block.3} parent=39 // pred_region
          %s303 = smul.u32 14, %s17
          %p304 = scmp.lt.s32.totalorder %s303, 27
          %s305 = scalar_select %p304, %s303, 27
          %s306 = smul.addr %s305, 2
          %s307 = smul.addr %s306, 4
          %s308 = scalar_lea.vmem %s2, %s307
          %s309 = smul.u32 14, %s17
        $region44: #{dense_block.3} parent=39 // pred_fallthru
          _
        // Predicated region
        $region45: #{dense_block.3} parent=39 // pred_check
          %p310 = pneg %p105
        $region46: #{dense_block.3} parent=39 // pred_check_branch
          %312 = sbr.rel (%p310) target = $region48
        $region47: #{dense_block.3} parent=39 // pred_region
          %s313 = smul.u32 14, %s17
          %p314 = scmp.lt.s32.totalorder %s313, 27
          %s315 = scalar_select %p314, %s313, 27
          %s316 = smul.addr %s315, 8
          %s317 = scalar_lea.vmem %s3, %s316
          %s318 = smul.u32 14, %s17
        $region48: #{dense_block.3} parent=39 // pred_fallthru
          _
        // Predicated region
        $region49: #{dense_block.3} parent=39 // pred_check
          %p319 = pneg %p131
        $region50: #{dense_block.3} parent=39 // pred_check_branch
          %321 = sbr.rel (%p319) target = $region52
        $region51: #{dense_block.3} parent=39 // pred_region
          %s322 = smul.u32 14, %s17
          %p323 = scmp.lt.s32.totalorder %s322, 27
          %s324 = scalar_select %p323, %s322, 27
          %s325 = smul.addr %s324, 8
          %s326 = scalar_lea.vmem %s4, %s325
          %s327 = smul.u32 14, %s17
        $region52: #{dense_block.3} parent=39 // pred_fallthru
          _
      $region40: #{dense_block.3} parent=5 // pred_fallthru
        _
      %p328 = scmp.le.s32.totalorder 1, %s17
      %p329 = scmp.lt.s32.totalorder %s17, 3
      %p330 = pnand %p328, %p329
      %p331 = pneg %p330
      // Predicated region
      $region53: #{dense_block.3} parent=5 // pred_check
        _
      $region54: #{dense_block.3} parent=5 // pred_check_branch
        %333 = sbr.rel (%p330) target = $region56
      $region55: #{dense_block.3} parent=5 // pred_region
        %s334 = ssub.s32 %s17, 1
        // Predicated region
        $region57: #{dense_block.3} parent=55 // pred_check
          %p335 = pneg %p38
        $region58: #{dense_block.3} parent=55 // pred_check_branch
          %337 = sbr.rel (%p335) target = $region60
        $region59: #{dense_block.3} parent=55 // pred_region
          %338 = dma.done [#allocation3], 16
        $region60: #{dense_block.3} parent=55 // pred_fallthru
          _
        // Predicated region
        $region61: #{dense_block.3} parent=55 // pred_check
          %p339 = pneg %p59
        $region62: #{dense_block.3} parent=55 // pred_check_branch
          %341 = sbr.rel (%p339) target = $region64
        $region63: #{dense_block.3} parent=55 // pred_region
          %342 = dma.done [#allocation5], 16
        $region64: #{dense_block.3} parent=55 // pred_fallthru
          _
        %343 = sfence
        %p344 = pneg %p38
        %p345 = pneg %p35
        %p346 = pneg %p59
        %p347 = pneg %p56
        %s348 = smul.u32 14, %s22
        %p349 = scmp.lt.s32.totalorder %s348, 27
        %s350 = scalar_select %p349, %s348, 27
        %s351 = smul.addr %s350, 2
        %s352 = smul.addr %s351, 4
        %s353 = scalar_lea.vmem %s2, %s352
        %p354 = pneg %p85
        %p355 = pneg %p82
        %s356 = smul.u32 14, %s22
        %p357 = scmp.lt.s32.totalorder %s356, 27
        %s358 = scalar_select %p357, %s356, 27
        %s359 = smul.addr %s358, 8
        %s360 = scalar_lea.vmem %s3, %s359
        %p361 = pneg %p111
        %p362 = pneg %p108
        %s363 = smul.u32 14, %s22
        %p364 = scmp.lt.s32.totalorder %s363, 27
        %s365 = scalar_select %p364, %s363, 27
        %s366 = smul.addr %s365, 8
        %s367 = scalar_lea.vmem %s4, %s366
        %p368 = pneg %p137
        %p369 = pneg %p134
        %p370 = pneg %p158
        %p371 = pneg %p155
        %p372 = pneg %p179
        %p373 = pneg %p176
        %p374 = pneg %p200
        %p375 = pneg %p197
        %p376 = pneg %p221
        %p377 = pneg %p218
        %p378 = pneg %p247
        %p379 = pneg %p244
        %s380 = smul.u32 14, %s22
        %p381 = scmp.lt.s32.totalorder %s380, 27
        %s382 = scalar_select %p381, %s380, 27
        %s383 = smul.addr %s382, 2
        %s384 = smul.addr %s383, 8
        %s385 = scalar_lea.vmem %s9, %s384
        %s386 = smul.u32 14, %s22
        %p387 = scmp.lt.s32.totalorder %s386, 27
        %s388 = scalar_select %p387, %s386, 27
        %s389 = smul.addr %s388, 2
        %s390 = smul.addr %s389, 4
        %s391 = scalar_lea.vmem %s2, %s390
        %s392 = smul.u32 14, %s22
        %s393 = smul.u32 14, %s22
        %p394 = scmp.lt.s32.totalorder %s393, 27
        %s395 = scalar_select %p394, %s393, 27
        %s396 = smul.addr %s395, 8
        %s397 = scalar_lea.vmem %s3, %s396
        %s398 = smul.u32 14, %s22
        %s399 = smul.u32 14, %s22
        %p400 = scmp.lt.s32.totalorder %s399, 27
        %s401 = scalar_select %p400, %s399, 27
        %s402 = smul.addr %s401, 8
        %s403 = scalar_lea.vmem %s4, %s402
        %s404 = smul.u32 14, %s22
        %s405 = smul.u32 14, %s22
        %p406 = scmp.lt.s32.totalorder %s405, 27
        %s407 = scalar_select %p406, %s405, 27
        %s408 = smul.addr %s407, 2
        %s409 = smul.addr %s408, 8
        %s410 = scalar_lea.vmem %s9, %s409
        %s411 = smul.u32 14, %s22
        %v412 = vld [vmem:[%s391] sm:$0xff]
        %v413 = vld [vmem:[%s391 + $0x8] sm:$0xff]
        %v414 = vld [vmem:[%s391 + $0x10] sm:$0xff]
        %v415 = vld [vmem:[%s391 + $0x18] sm:$0xff]
        %v416 = vld [vmem:[%s391 + $0x20] sm:$0xff]
        %v417 = vld [vmem:[%s391 + $0x28] sm:$0xff]
        %v418 = vld [vmem:[%s391 + $0x30] sm:$0xff]
        %v419 = vld [vmem:[%s391 + $0x38] sm:$0xff]
        %v420 = vld [vmem:[%s391 + $0x40] sm:$0xff]
        %v421 = vld [vmem:[%s391 + $0x48] sm:$0xff]
        %v422 = vld [vmem:[%s391 + $0x50] sm:$0xff]
        %v423 = vld [vmem:[%s391 + $0x58] sm:$0xff]
        %v424 = vld [vmem:[%s391 + $0x60] sm:$0xff]
        %v425 = vld [vmem:[%s391 + $0x68] sm:$0xff]
        %v426 = vunpack.c.l.bf16 %v412
        %v427 = vunpack.c.h.bf16 %v412
        %v428 = vunpack.c.l.bf16 %v413
        %v429 = vunpack.c.h.bf16 %v413
        %v430 = vunpack.c.l.bf16 %v414
        %v431 = vunpack.c.h.bf16 %v414
        %v432 = vunpack.c.l.bf16 %v415
        %v433 = vunpack.c.h.bf16 %v415
        %v434 = vunpack.c.l.bf16 %v416
        %v435 = vunpack.c.h.bf16 %v416
        %v436 = vunpack.c.l.bf16 %v417
        %v437 = vunpack.c.h.bf16 %v417
        %v438 = vunpack.c.l.bf16 %v418
        %v439 = vunpack.c.h.bf16 %v418
        %v440 = vunpack.c.l.bf16 %v419
        %v441 = vunpack.c.h.bf16 %v419
        %v442 = vunpack.c.l.bf16 %v420
        %v443 = vunpack.c.h.bf16 %v420
        %v444 = vunpack.c.l.bf16 %v421
        %v445 = vunpack.c.h.bf16 %v421
        %v446 = vunpack.c.l.bf16 %v422
        %v447 = vunpack.c.h.bf16 %v422
        %v448 = vunpack.c.l.bf16 %v423
        %v449 = vunpack.c.h.bf16 %v423
        %v450 = vunpack.c.l.bf16 %v424
        %v451 = vunpack.c.h.bf16 %v424
        %v452 = vunpack.c.l.bf16 %v425
        %v453 = vunpack.c.h.bf16 %v425
        %v454 = vld [vmem:[%s397] sm:$0xff]
        %v455 = vld [vmem:[%s397 + $0x8] sm:$0xff]
        %v456 = vld [vmem:[%s397 + $0x10] sm:$0xff]
        %v457 = vld [vmem:[%s397 + $0x18] sm:$0xff]
        %v458 = vld [vmem:[%s397 + $0x20] sm:$0xff]
        %v459 = vld [vmem:[%s397 + $0x28] sm:$0xff]
        %v460 = vld [vmem:[%s397 + $0x30] sm:$0xff]
        %v461 = vld [vmem:[%s397 + $0x38] sm:$0xff]
        %v462 = vld [vmem:[%s397 + $0x40] sm:$0xff]
        %v463 = vld [vmem:[%s397 + $0x48] sm:$0xff]
        %v464 = vld [vmem:[%s397 + $0x50] sm:$0xff]
        %v465 = vld [vmem:[%s397 + $0x58] sm:$0xff]
        %v466 = vld [vmem:[%s397 + $0x60] sm:$0xff]
        %v467 = vld [vmem:[%s397 + $0x68] sm:$0xff]
        %v468 = vmul.f32 %v454, 0.00625
        %v469 = vmul.f32 %v455, 0.00625
        %v470 = vmul.f32 %v456, 0.00625
        %v471 = vmul.f32 %v457, 0.00625
        %v472 = vmul.f32 %v458, 0.00625
        %v473 = vmul.f32 %v459, 0.00625
        %v474 = vmul.f32 %v460, 0.00625
        %v475 = vmul.f32 %v461, 0.00625
        %v476 = vmul.f32 %v462, 0.00625
        %v477 = vmul.f32 %v463, 0.00625
        %v478 = vmul.f32 %v464, 0.00625
        %v479 = vmul.f32 %v465, 0.00625
        %v480 = vmul.f32 %v466, 0.00625
        %v481 = vmul.f32 %v467, 0.00625
        %v482 = vld [vmem:[%s403] sm:$0xff]
        %v483 = vld [vmem:[%s403 + $0x8] sm:$0xff]
        %v484 = vld [vmem:[%s403 + $0x10] sm:$0xff]
        %v485 = vld [vmem:[%s403 + $0x18] sm:$0xff]
        %v486 = vld [vmem:[%s403 + $0x20] sm:$0xff]
        %v487 = vld [vmem:[%s403 + $0x28] sm:$0xff]
        %v488 = vld [vmem:[%s403 + $0x30] sm:$0xff]
        %v489 = vld [vmem:[%s403 + $0x38] sm:$0xff]
        %v490 = vld [vmem:[%s403 + $0x40] sm:$0xff]
        %v491 = vld [vmem:[%s403 + $0x48] sm:$0xff]
        %v492 = vld [vmem:[%s403 + $0x50] sm:$0xff]
        %v493 = vld [vmem:[%s403 + $0x58] sm:$0xff]
        %v494 = vld [vmem:[%s403 + $0x60] sm:$0xff]
        %v495 = vld [vmem:[%s403 + $0x68] sm:$0xff]
        %v496 = vmul.f32 %v468, 160.0
        %v497 = vmul.f32 %v469, 160.0
        %v498 = vmul.f32 %v470, 160.0
        %v499 = vmul.f32 %v471, 160.0
        %v500 = vmul.f32 %v472, 160.0
        %v501 = vmul.f32 %v473, 160.0
        %v502 = vmul.f32 %v474, 160.0
        %v503 = vmul.f32 %v475, 160.0
        %v504 = vmul.f32 %v476, 160.0
        %v505 = vmul.f32 %v477, 160.0
        %v506 = vmul.f32 %v478, 160.0
        %v507 = vmul.f32 %v479, 160.0
        %v508 = vmul.f32 %v480, 160.0
        %v509 = vmul.f32 %v481, 160.0
        %v510 = vmul.f32 %v496, %v468
        %v511 = vmul.f32 %v497, %v469
        %v512 = vmul.f32 %v498, %v470
        %v513 = vmul.f32 %v499, %v471
        %v514 = vmul.f32 %v500, %v472
        %v515 = vmul.f32 %v501, %v473
        %v516 = vmul.f32 %v502, %v474
        %v517 = vmul.f32 %v503, %v475
        %v518 = vmul.f32 %v504, %v476
        %v519 = vmul.f32 %v505, %v477
        %v520 = vmul.f32 %v506, %v478
        %v521 = vmul.f32 %v507, %v479
        %v522 = vmul.f32 %v508, %v480
        %v523 = vmul.f32 %v509, %v481
        %v524 = vsub.f32 %v482, %v510
        %v525 = vsub.f32 %v483, %v511
        %v526 = vsub.f32 %v484, %v512
        %v527 = vsub.f32 %v485, %v513
        %v528 = vsub.f32 %v486, %v514
        %v529 = vsub.f32 %v487, %v515
        %v530 = vsub.f32 %v488, %v516
        %v531 = vsub.f32 %v489, %v517
        %v532 = vsub.f32 %v490, %v518
        %v533 = vsub.f32 %v491, %v519
        %v534 = vsub.f32 %v492, %v520
        %v535 = vsub.f32 %v493, %v521
        %v536 = vsub.f32 %v494, %v522
        %v537 = vsub.f32 %v495, %v523
        %v538 = vmul.f32 %v524, 0.006289308
        %v539 = vmul.f32 %v525, 0.006289308
        %v540 = vmul.f32 %v526, 0.006289308
        %v541 = vmul.f32 %v527, 0.006289308
        %v542 = vmul.f32 %v528, 0.006289308
        %v543 = vmul.f32 %v529, 0.006289308
        %v544 = vmul.f32 %v530, 0.006289308
        %v545 = vmul.f32 %v531, 0.006289308
        %v546 = vmul.f32 %v532, 0.006289308
        %v547 = vmul.f32 %v533, 0.006289308
        %v548 = vmul.f32 %v534, 0.006289308
        %v549 = vmul.f32 %v535, 0.006289308
        %v550 = vmul.f32 %v536, 0.006289308
        %v551 = vmul.f32 %v537, 0.006289308
        %v552 = vmax.f32 %v538, 0.0
        %v553 = vmax.f32 %v539, 0.0
        %v554 = vmax.f32 %v540, 0.0
        %v555 = vmax.f32 %v541, 0.0
        %v556 = vmax.f32 %v542, 0.0
        %v557 = vmax.f32 %v543, 0.0
        %v558 = vmax.f32 %v544, 0.0
        %v559 = vmax.f32 %v545, 0.0
        %v560 = vmax.f32 %v546, 0.0
        %v561 = vmax.f32 %v547, 0.0
        %v562 = vmax.f32 %v548, 0.0
        %v563 = vmax.f32 %v549, 0.0
        %v564 = vmax.f32 %v550, 0.0
        %v565 = vmax.f32 %v551, 0.0
        %s566 = sld [smem:[#allocation2]]
        %v567 = vstv %s566
        %v568 = vmul.f32 %v567, %v468
        %v569 = vmul.f32 %v567, %v469
        %v570 = vmul.f32 %v567, %v470
        %v571 = vmul.f32 %v567, %v471
        %v572 = vmul.f32 %v567, %v472
        %v573 = vmul.f32 %v567, %v473
        %v574 = vmul.f32 %v567, %v474
        %v575 = vmul.f32 %v567, %v475
        %v576 = vmul.f32 %v567, %v476
        %v577 = vmul.f32 %v567, %v477
        %v578 = vmul.f32 %v567, %v478
        %v579 = vmul.f32 %v567, %v479
        %v580 = vmul.f32 %v567, %v480
        %v581 = vmul.f32 %v567, %v481
        %s582 = sld [smem:[#allocation2 + $0x1]]
        %v583 = vld [vmem:[%s5] sm:$0x3]
        %v584 = vstv %s582
        %v585 = vmul.f32 %v584, %v583
        %587 = vset.pattern.permute.xlu0 0
        %588 = vperm.xlu0 %587, %v568
        %v589 = vpop.permute.xlu0 %588
        %592 = vset.pattern.permute.xlu0 0
        %593 = vperm.xlu0 %592, %v569
        %v594 = vpop.permute.xlu0 %593
        %597 = vset.pattern.permute.xlu0 0
        %598 = vperm.xlu0 %597, %v570
        %v599 = vpop.permute.xlu0 %598
        %602 = vset.pattern.permute.xlu0 0
        %603 = vperm.xlu0 %602, %v571
        %v604 = vpop.permute.xlu0 %603
        %607 = vset.pattern.permute.xlu0 0
        %608 = vperm.xlu0 %607, %v572
        %v609 = vpop.permute.xlu0 %608
        %612 = vset.pattern.permute.xlu0 0
        %613 = vperm.xlu0 %612, %v573
        %v614 = vpop.permute.xlu0 %613
        %617 = vset.pattern.permute.xlu0 0
        %618 = vperm.xlu0 %617, %v574
        %v619 = vpop.permute.xlu0 %618
        %622 = vset.pattern.permute.xlu0 0
        %623 = vperm.xlu0 %622, %v575
        %v624 = vpop.permute.xlu0 %623
        %627 = vset.pattern.permute.xlu0 0
        %628 = vperm.xlu0 %627, %v576
        %v629 = vpop.permute.xlu0 %628
        %632 = vset.pattern.permute.xlu0 0
        %633 = vperm.xlu0 %632, %v577
        %v634 = vpop.permute.xlu0 %633
        %637 = vset.pattern.permute.xlu0 0
        %638 = vperm.xlu0 %637, %v578
        %v639 = vpop.permute.xlu0 %638
        %642 = vset.pattern.permute.xlu0 0
        %643 = vperm.xlu0 %642, %v579
        %v644 = vpop.permute.xlu0 %643
        %647 = vset.pattern.permute.xlu0 0
        %648 = vperm.xlu0 %647, %v580
        %v649 = vpop.permute.xlu0 %648
        %652 = vset.pattern.permute.xlu0 0
        %653 = vperm.xlu0 %652, %v581
        %v654 = vpop.permute.xlu0 %653
        %v657 = vlaneseq
        %v658 = vshrl.u32 %v657, 7
        %v659 = vsub.s32 0, %v658
        %v660 = vrot.slane %v585, %v659
        %v661 = vlaneseq
        %v662 = vshrl.u32 %v661, 7
        %v663 = vsub.s32 1, %v662
        %v664 = vrot.slane %v585, %v663
        %v667 = vadd.f32 %v589, %v660
        %v668 = vadd.f32 %v589, %v664
        %v669 = vadd.f32 %v594, %v660
        %v670 = vadd.f32 %v594, %v664
        %v671 = vadd.f32 %v599, %v660
        %v672 = vadd.f32 %v599, %v664
        %v673 = vadd.f32 %v604, %v660
        %v674 = vadd.f32 %v604, %v664
        %v675 = vadd.f32 %v609, %v660
        %v676 = vadd.f32 %v609, %v664
        %v677 = vadd.f32 %v614, %v660
        %v678 = vadd.f32 %v614, %v664
        %v679 = vadd.f32 %v619, %v660
        %v680 = vadd.f32 %v619, %v664
        %v681 = vadd.f32 %v624, %v660
        %v682 = vadd.f32 %v624, %v664
        %v683 = vadd.f32 %v629, %v660
        %v684 = vadd.f32 %v629, %v664
        %v685 = vadd.f32 %v634, %v660
        %v686 = vadd.f32 %v634, %v664
        %v687 = vadd.f32 %v639, %v660
        %v688 = vadd.f32 %v639, %v664
        %v689 = vadd.f32 %v644, %v660
        %v690 = vadd.f32 %v644, %v664
        %v691 = vadd.f32 %v649, %v660
        %v692 = vadd.f32 %v649, %v664
        %v693 = vadd.f32 %v654, %v660
        %v694 = vadd.f32 %v654, %v664
        %s695 = sld [smem:[#allocation4]]
        %v696 = vstv %s695
        %v697 = vmul.f32 %v696, %v552
        %v698 = vmul.f32 %v696, %v553
        %v699 = vmul.f32 %v696, %v554
        %v700 = vmul.f32 %v696, %v555
        %v701 = vmul.f32 %v696, %v556
        %v702 = vmul.f32 %v696, %v557
        %v703 = vmul.f32 %v696, %v558
        %v704 = vmul.f32 %v696, %v559
        %v705 = vmul.f32 %v696, %v560
        %v706 = vmul.f32 %v696, %v561
        %v707 = vmul.f32 %v696, %v562
        %v708 = vmul.f32 %v696, %v563
        %v709 = vmul.f32 %v696, %v564
        %v710 = vmul.f32 %v696, %v565
        %s711 = sld [smem:[#allocation4 + $0x1]]
        %v712 = vld [vmem:[%s6] sm:$0x3]
        %v713 = vstv %s711
        %v714 = vmul.f32 %v713, %v712
        %716 = vset.pattern.permute.xlu0 0
        %717 = vperm.xlu0 %716, %v697
        %v718 = vpop.permute.xlu0 %717
        %721 = vset.pattern.permute.xlu0 0
        %722 = vperm.xlu0 %721, %v698
        %v723 = vpop.permute.xlu0 %722
        %726 = vset.pattern.permute.xlu0 0
        %727 = vperm.xlu0 %726, %v699
        %v728 = vpop.permute.xlu0 %727
        %731 = vset.pattern.permute.xlu0 0
        %732 = vperm.xlu0 %731, %v700
        %v733 = vpop.permute.xlu0 %732
        %736 = vset.pattern.permute.xlu0 0
        %737 = vperm.xlu0 %736, %v701
        %v738 = vpop.permute.xlu0 %737
        %741 = vset.pattern.permute.xlu0 0
        %742 = vperm.xlu0 %741, %v702
        %v743 = vpop.permute.xlu0 %742
        %746 = vset.pattern.permute.xlu0 0
        %747 = vperm.xlu0 %746, %v703
        %v748 = vpop.permute.xlu0 %747
        %751 = vset.pattern.permute.xlu0 0
        %752 = vperm.xlu0 %751, %v704
        %v753 = vpop.permute.xlu0 %752
        %756 = vset.pattern.permute.xlu0 0
        %757 = vperm.xlu0 %756, %v705
        %v758 = vpop.permute.xlu0 %757
        %761 = vset.pattern.permute.xlu0 0
        %762 = vperm.xlu0 %761, %v706
        %v763 = vpop.permute.xlu0 %762
        %766 = vset.pattern.permute.xlu0 0
        %767 = vperm.xlu0 %766, %v707
        %v768 = vpop.permute.xlu0 %767
        %771 = vset.pattern.permute.xlu0 0
        %772 = vperm.xlu0 %771, %v708
        %v773 = vpop.permute.xlu0 %772
        %776 = vset.pattern.permute.xlu0 0
        %777 = vperm.xlu0 %776, %v709
        %v778 = vpop.permute.xlu0 %777
        %781 = vset.pattern.permute.xlu0 0
        %782 = vperm.xlu0 %781, %v710
        %v783 = vpop.permute.xlu0 %782
        %v786 = vlaneseq
        %v787 = vshrl.u32 %v786, 7
        %v788 = vsub.s32 0, %v787
        %v789 = vrot.slane %v714, %v788
        %v790 = vlaneseq
        %v791 = vshrl.u32 %v790, 7
        %v792 = vsub.s32 1, %v791
        %v793 = vrot.slane %v714, %v792
        %v796 = vadd.f32 %v718, %v789
        %v797 = vadd.f32 %v718, %v793
        %v798 = vadd.f32 %v723, %v789
        %v799 = vadd.f32 %v723, %v793
        %v800 = vadd.f32 %v728, %v789
        %v801 = vadd.f32 %v728, %v793
        %v802 = vadd.f32 %v733, %v789
        %v803 = vadd.f32 %v733, %v793
        %v804 = vadd.f32 %v738, %v789
        %v805 = vadd.f32 %v738, %v793
        %v806 = vadd.f32 %v743, %v789
        %v807 = vadd.f32 %v743, %v793
        %v808 = vadd.f32 %v748, %v789
        %v809 = vadd.f32 %v748, %v793
        %v810 = vadd.f32 %v753, %v789
        %v811 = vadd.f32 %v753, %v793
        %v812 = vadd.f32 %v758, %v789
        %v813 = vadd.f32 %v758, %v793
        %v814 = vadd.f32 %v763, %v789
        %v815 = vadd.f32 %v763, %v793
        %v816 = vadd.f32 %v768, %v789
        %v817 = vadd.f32 %v768, %v793
        %v818 = vadd.f32 %v773, %v789
        %v819 = vadd.f32 %v773, %v793
        %v820 = vadd.f32 %v778, %v789
        %v821 = vadd.f32 %v778, %v793
        %v822 = vadd.f32 %v783, %v789
        %v823 = vadd.f32 %v783, %v793
        %v824 = vsub.f32 %v426, %v667
        %v825 = vsub.f32 %v427, %v668
        %v826 = vsub.f32 %v428, %v669
        %v827 = vsub.f32 %v429, %v670
        %v828 = vsub.f32 %v430, %v671
        %v829 = vsub.f32 %v431, %v672
        %v830 = vsub.f32 %v432, %v673
        %v831 = vsub.f32 %v433, %v674
        %v832 = vsub.f32 %v434, %v675
        %v833 = vsub.f32 %v435, %v676
        %v834 = vsub.f32 %v436, %v677
        %v835 = vsub.f32 %v437, %v678
        %v836 = vsub.f32 %v438, %v679
        %v837 = vsub.f32 %v439, %v680
        %v838 = vsub.f32 %v440, %v681
        %v839 = vsub.f32 %v441, %v682
        %v840 = vsub.f32 %v442, %v683
        %v841 = vsub.f32 %v443, %v684
        %v842 = vsub.f32 %v444, %v685
        %v843 = vsub.f32 %v445, %v686
        %v844 = vsub.f32 %v446, %v687
        %v845 = vsub.f32 %v447, %v688
        %v846 = vsub.f32 %v448, %v689
        %v847 = vsub.f32 %v449, %v690
        %v848 = vsub.f32 %v450, %v691
        %v849 = vsub.f32 %v451, %v692
        %v850 = vsub.f32 %v452, %v693
        %v851 = vsub.f32 %v453, %v694
        %v852 = vadd.f32 %v796, 1e-05
        %v853 = vadd.f32 %v797, 1e-05
        %v854 = vadd.f32 %v798, 1e-05
        %v855 = vadd.f32 %v799, 1e-05
        %v856 = vadd.f32 %v800, 1e-05
        %v857 = vadd.f32 %v801, 1e-05
        %v858 = vadd.f32 %v802, 1e-05
        %v859 = vadd.f32 %v803, 1e-05
        %v860 = vadd.f32 %v804, 1e-05
        %v861 = vadd.f32 %v805, 1e-05
        %v862 = vadd.f32 %v806, 1e-05
        %v863 = vadd.f32 %v807, 1e-05
        %v864 = vadd.f32 %v808, 1e-05
        %v865 = vadd.f32 %v809, 1e-05
        %v866 = vadd.f32 %v810, 1e-05
        %v867 = vadd.f32 %v811, 1e-05
        %v868 = vadd.f32 %v812, 1e-05
        %v869 = vadd.f32 %v813, 1e-05
        %v870 = vadd.f32 %v814, 1e-05
        %v871 = vadd.f32 %v815, 1e-05
        %v872 = vadd.f32 %v816, 1e-05
        %v873 = vadd.f32 %v817, 1e-05
        %v874 = vadd.f32 %v818, 1e-05
        %v875 = vadd.f32 %v819, 1e-05
        %v876 = vadd.f32 %v820, 1e-05
        %v877 = vadd.f32 %v821, 1e-05
        %v878 = vadd.f32 %v822, 1e-05
        %v879 = vadd.f32 %v823, 1e-05
        %v880 = vrsqrt.pop %v852
        %v881 = vrsqrt.pop %v853
        %v882 = vrsqrt.pop %v854
        %v883 = vrsqrt.pop %v855
        %v884 = vrsqrt.pop %v856
        %v885 = vrsqrt.pop %v857
        %v886 = vrsqrt.pop %v858
        %v887 = vrsqrt.pop %v859
        %v888 = vrsqrt.pop %v860
        %v889 = vrsqrt.pop %v861
        %v890 = vrsqrt.pop %v862
        %v891 = vrsqrt.pop %v863
        %v892 = vrsqrt.pop %v864
        %v893 = vrsqrt.pop %v865
        %v894 = vrsqrt.pop %v866
        %v895 = vrsqrt.pop %v867
        %v896 = vrsqrt.pop %v868
        %v897 = vrsqrt.pop %v869
        %v898 = vrsqrt.pop %v870
        %v899 = vrsqrt.pop %v871
        %v900 = vrsqrt.pop %v872
        %v901 = vrsqrt.pop %v873
        %v902 = vrsqrt.pop %v874
        %v903 = vrsqrt.pop %v875
        %v904 = vrsqrt.pop %v876
        %v905 = vrsqrt.pop %v877
        %v906 = vrsqrt.pop %v878
        %v907 = vrsqrt.pop %v879
        %v908 = vmul.f32 %v824, %v880
        %v909 = vmul.f32 %v825, %v881
        %v910 = vmul.f32 %v826, %v882
        %v911 = vmul.f32 %v827, %v883
        %v912 = vmul.f32 %v828, %v884
        %v913 = vmul.f32 %v829, %v885
        %v914 = vmul.f32 %v830, %v886
        %v915 = vmul.f32 %v831, %v887
        %v916 = vmul.f32 %v832, %v888
        %v917 = vmul.f32 %v833, %v889
        %v918 = vmul.f32 %v834, %v890
        %v919 = vmul.f32 %v835, %v891
        %v920 = vmul.f32 %v836, %v892
        %v921 = vmul.f32 %v837, %v893
        %v922 = vmul.f32 %v838, %v894
        %v923 = vmul.f32 %v839, %v895
        %v924 = vmul.f32 %v840, %v896
        %v925 = vmul.f32 %v841, %v897
        %v926 = vmul.f32 %v842, %v898
        %v927 = vmul.f32 %v843, %v899
        %v928 = vmul.f32 %v844, %v900
        %v929 = vmul.f32 %v845, %v901
        %v930 = vmul.f32 %v846, %v902
        %v931 = vmul.f32 %v847, %v903
        %v932 = vmul.f32 %v848, %v904
        %v933 = vmul.f32 %v849, %v905
        %v934 = vmul.f32 %v850, %v906
        %v935 = vmul.f32 %v851, %v907
        %v936 = vld [vmem:[%s7] sm:$0x3]
        %v938 = vlaneseq
        %v939 = vshrl.u32 %v938, 7
        %v940 = vsub.s32 0, %v939
        %v941 = vrot.slane %v936, %v940
        %v942 = vlaneseq
        %v943 = vshrl.u32 %v942, 7
        %v944 = vsub.s32 1, %v943
        %v945 = vrot.slane %v936, %v944
        %v948 = vmul.f32 %v908, %v941
        %v949 = vmul.f32 %v909, %v945
        %v950 = vmul.f32 %v910, %v941
        %v951 = vmul.f32 %v911, %v945
        %v952 = vmul.f32 %v912, %v941
        %v953 = vmul.f32 %v913, %v945
        %v954 = vmul.f32 %v914, %v941
        %v955 = vmul.f32 %v915, %v945
        %v956 = vmul.f32 %v916, %v941
        %v957 = vmul.f32 %v917, %v945
        %v958 = vmul.f32 %v918, %v941
        %v959 = vmul.f32 %v919, %v945
        %v960 = vmul.f32 %v920, %v941
        %v961 = vmul.f32 %v921, %v945
        %v962 = vmul.f32 %v922, %v941
        %v963 = vmul.f32 %v923, %v945
        %v964 = vmul.f32 %v924, %v941
        %v965 = vmul.f32 %v925, %v945
        %v966 = vmul.f32 %v926, %v941
        %v967 = vmul.f32 %v927, %v945
        %v968 = vmul.f32 %v928, %v941
        %v969 = vmul.f32 %v929, %v945
        %v970 = vmul.f32 %v930, %v941
        %v971 = vmul.f32 %v931, %v945
        %v972 = vmul.f32 %v932, %v941
        %v973 = vmul.f32 %v933, %v945
        %v974 = vmul.f32 %v934, %v941
        %v975 = vmul.f32 %v935, %v945
        %v976 = vld [vmem:[%s8] sm:$0x3]
        %v978 = vlaneseq
        %v979 = vshrl.u32 %v978, 7
        %v980 = vsub.s32 0, %v979
        %v981 = vrot.slane %v976, %v980
        %v982 = vlaneseq
        %v983 = vshrl.u32 %v982, 7
        %v984 = vsub.s32 1, %v983
        %v985 = vrot.slane %v976, %v984
        %v988 = vadd.f32 %v948, %v981
        %v989 = vadd.f32 %v949, %v985
        %v990 = vadd.f32 %v950, %v981
        %v991 = vadd.f32 %v951, %v985
        %v992 = vadd.f32 %v952, %v981
        %v993 = vadd.f32 %v953, %v985
        %v994 = vadd.f32 %v954, %v981
        %v995 = vadd.f32 %v955, %v985
        %v996 = vadd.f32 %v956, %v981
        %v997 = vadd.f32 %v957, %v985
        %v998 = vadd.f32 %v958, %v981
        %v999 = vadd.f32 %v959, %v985
        %v1000 = vadd.f32 %v960, %v981
        %v1001 = vadd.f32 %v961, %v985
        %v1002 = vadd.f32 %v962, %v981
        %v1003 = vadd.f32 %v963, %v985
        %v1004 = vadd.f32 %v964, %v981
        %v1005 = vadd.f32 %v965, %v985
        %v1006 = vadd.f32 %v966, %v981
        %v1007 = vadd.f32 %v967, %v985
        %v1008 = vadd.f32 %v968, %v981
        %v1009 = vadd.f32 %v969, %v985
        %v1010 = vadd.f32 %v970, %v981
        %v1011 = vadd.f32 %v971, %v985
        %v1012 = vadd.f32 %v972, %v981
        %v1013 = vadd.f32 %v973, %v985
        %v1014 = vadd.f32 %v974, %v981
        %v1015 = vadd.f32 %v975, %v985
        %1016 = vst [vmem:[%s410] sm:$0xff] %v988
        %1017 = vst [vmem:[%s410 + $0x8] sm:$0xff] %v989
        %1018 = vst [vmem:[%s410 + $0x10] sm:$0xff] %v990
        %1019 = vst [vmem:[%s410 + $0x18] sm:$0xff] %v991
        %1020 = vst [vmem:[%s410 + $0x20] sm:$0xff] %v992
        %1021 = vst [vmem:[%s410 + $0x28] sm:$0xff] %v993
        %1022 = vst [vmem:[%s410 + $0x30] sm:$0xff] %v994
        %1023 = vst [vmem:[%s410 + $0x38] sm:$0xff] %v995
        %1024 = vst [vmem:[%s410 + $0x40] sm:$0xff] %v996
        %1025 = vst [vmem:[%s410 + $0x48] sm:$0xff] %v997
        %1026 = vst [vmem:[%s410 + $0x50] sm:$0xff] %v998
        %1027 = vst [vmem:[%s410 + $0x58] sm:$0xff] %v999
        %1028 = vst [vmem:[%s410 + $0x60] sm:$0xff] %v1000
        %1029 = vst [vmem:[%s410 + $0x68] sm:$0xff] %v1001
        %1030 = vst [vmem:[%s410 + $0x70] sm:$0xff] %v1002
        %1031 = vst [vmem:[%s410 + $0x78] sm:$0xff] %v1003
        %1032 = vst [vmem:[%s410 + $0x80] sm:$0xff] %v1004
        %1033 = vst [vmem:[%s410 + $0x88] sm:$0xff] %v1005
        %1034 = vst [vmem:[%s410 + $0x90] sm:$0xff] %v1006
        %1035 = vst [vmem:[%s410 + $0x98] sm:$0xff] %v1007
        %1036 = vst [vmem:[%s410 + $0xa0] sm:$0xff] %v1008
        %1037 = vst [vmem:[%s410 + $0xa8] sm:$0xff] %v1009
        %1038 = vst [vmem:[%s410 + $0xb0] sm:$0xff] %v1010
        %1039 = vst [vmem:[%s410 + $0xb8] sm:$0xff] %v1011
        %1040 = vst [vmem:[%s410 + $0xc0] sm:$0xff] %v1012
        %1041 = vst [vmem:[%s410 + $0xc8] sm:$0xff] %v1013
        %1042 = vst [vmem:[%s410 + $0xd0] sm:$0xff] %v1014
        %1043 = vst [vmem:[%s410 + $0xd8] sm:$0xff] %v1015
        %s1044 = smul.u32 14, %s22
        %p1045 = scmp.lt.s32.totalorder %s1044, 27
        %s1046 = scalar_select %p1045, %s1044, 27
        %s1047 = smul.addr %s1046, 2
        %s1048 = smul.addr %s1047, 8
        %s1049 = scalar_lea.vmem %s9, %s1048
        // Predicated region
        $region65: #{dense_block.3} parent=55 // pred_check
          %p1050 = pneg %p244
        $region66: #{dense_block.3} parent=55 // pred_check_branch
          %1052 = sbr.rel (%p1050) target = $region68
        $region67: #{dense_block.3} parent=55 // pred_region
          %s1053 = smul.u32 14, %s22
        $region68: #{dense_block.3} parent=55 // pred_fallthru
          _
      $region56: #{dense_block.3} parent=5 // pred_fallthru
        _
      %p1054 = scmp.le.s32.totalorder 2, %s17
      // Predicated region
      $region69: #{dense_block.3} parent=5 // pred_check
        %p1055 = pneg %p1054
      $region70: #{dense_block.3} parent=5 // pred_check_branch
        %1057 = sbr.rel (%p1055) target = $region72
      $region71: #{dense_block.3} parent=5 // pred_region
        %s1058 = ssub.s32 %s17, 2
        // Predicated region
        $region73: #{dense_block.3} parent=71 // pred_check
          %p1059 = pneg %p250
        $region74: #{dense_block.3} parent=71 // pred_check_branch
          %1061 = sbr.rel (%p1059) target = $region76
        $region75: #{dense_block.3} parent=71 // pred_region
          %s1062 = smul.u32 14, %s23
          %p1063 = scmp.lt.s32.totalorder %s1062, 27
          %s1064 = scalar_select %p1063, %s1062, 27
          %s1065 = smul.addr %s1064, 2
          %s1066 = smul.addr %s1065, 8
          %s1067 = scalar_lea.vmem %s9, %s1066
        $region76: #{dense_block.3} parent=71 // pred_fallthru
          _
      $region72: #{dense_block.3} parent=5 // pred_fallthru
        _
    $region6: #{dense_block.3} parent=1 // loop_footer
      %s21 = sadd.s32 1, %s17
    $region7: #{dense_block.3} parent=1 // loop_footer_branch
      %16 = sbr.rel target = $region3
    $region8: #{dense_block.3} parent=1 // loop_exit
      _
    %1068 = vsyncpa [#allocation3], 1
    %s1069 = scalar_lea.sflag [#allocation3], 1
    %1070 = vsyncpa %s1069, 1
    %1071 = vsyncpa [#allocation5], 1

</llo_original>
